<compile_context>
chip_gen: v7x
topology: tpu7x:2x2x1
jax: 0.10.0
libtpu: 0.0.40
codegen_flags: <defaults>
</compile_context>

<pallas_src>
import functools

import jax
import jax.numpy as jnp
from jax.experimental import pallas as pl
from jax.experimental.pallas import tpu as pltpu


def adacnn_kernel(x_ref, top_ref, bot_ref, w1_ref, b1_ref, w2s_ref, b2_ref,
                  scales_ref, o_ref, xs_ref, p1_ref, h1_ref, *, K, W, tile_h):
    """One (batch image, H-tile) per grid step.

    x_ref:    (1, Cin, tile_h*W)      tile rows, channels on sublanes
    top_ref:  (1, 1, Cin, halo*W)     (K-1) rows above the tile (zero off-image)
    bot_ref:  (1, 1, Cin, halo*W)     (K-1) rows below the tile
    w1_ref:   (Cmid, K*K*Cin)   bf16  conv1 weights, contraction (kh, kw, cin)
    b1_ref:   (Cmid, 1)         f32
    w2s_ref:  (K*K*Cout, Cmid)  bf16  conv2 weights stacked per tap along M
    b2_ref:   (Cout, 1)         f32
    scales_ref: (2,) SMEM             [res_scale, x_scale]
    o_ref:    (1, Cout, tile_h*W)
    xs_ref:   (Cin, rows*W)     f32 VMEM scratch: x slab = halo|tile|halo
    p1_ref:   (K*K*Cin, rows*W) bf16 VMEM scratch: conv1 im2col
    h1_ref:   (Cmid, rows*W)    bf16 VMEM scratch: relu(conv1)
    """
    pad = K // 2
    halo = 2 * pad                      # rows of halo needed for 2 stacked convs
    rows = tile_h + 2 * halo            # slab rows held per step
    L = rows * W                        # slab lanes (flattened rows*W)
    Cin = x_ref.shape[1]
    Cmid = h1_ref.shape[0]
    Cout = o_ref.shape[1]
    i = pl.program_id(1)

    # Column-validity masks, generated in-kernel from an iota (vertical taps
    # need none: halo rows are real data, or real zeros at the image border).
    col = jax.lax.broadcasted_iota(jnp.int32, (1, L), 1) % W
    col_mask = {dx: ((col + dx >= 0) & (col + dx < W)).astype(jnp.float32)
                for dx in range(-pad, pad + 1) if dx != 0}

    def tap(src, dy, dx):
        """src[:, p + dy*W + dx], with columns leaving the image zeroed."""
        if dy and (dy * W) % 128 == 0:
            # Vertical component is a whole-vreg re-index when W is a multiple
            # of 128 (production); only the +-dx part needs cross-lane work.
            src = jnp.roll(src, -dy * W, axis=1)
            off = dx
        else:
            off = dy * W + dx
        if off:
            src = jnp.roll(src, -off, axis=1)
        if dx:
            src = src * col_mask[dx]
        return src

    # ---- assemble the x slab: [top halo | tile | bottom halo] --------------
    xs_ref[:, :halo * W] = top_ref[0, 0].astype(jnp.float32)
    xs_ref[:, halo * W:halo * W + tile_h * W] = x_ref[0].astype(jnp.float32)
    xs_ref[:, halo * W + tile_h * W:] = bot_ref[0, 0].astype(jnp.float32)
    x_slab = xs_ref[...]

    # ---- conv1: bf16 im2col (depth K*K*Cin) + one deep MXU matmul ----------
    t = 0
    for kh in range(K):
        for kw in range(K):
            p1_ref[t * Cin:(t + 1) * Cin, :] = (
                tap(x_slab, kh - pad, kw - pad).astype(p1_ref.dtype))
            t += 1
    h1 = jnp.dot(w1_ref[...], p1_ref[...], preferred_element_type=jnp.float32)
    h1_ref[...] = jnp.maximum(h1 + b1_ref[...], 0.0).astype(h1_ref.dtype)

    # conv2 must read ZERO (not conv1-of-zero-padding) at rows outside the
    # image; only the first / last tile have such rows inside their slab.
    @pl.when(i == 0)
    def _():
        h1_ref[:, pad * W:halo * W] = jnp.zeros((Cmid, pad * W), h1_ref.dtype)

    @pl.when(i == pl.num_programs(1) - 1)
    def _():
        h1_ref[:, (rows - halo) * W:(rows - pad) * W] = (
            jnp.zeros((Cmid, pad * W), h1_ref.dtype))

    # ---- conv2: taps stacked in M -> one matmul, shift/mask on the OUTPUT --
    z = jnp.dot(w2s_ref[...], h1_ref[...], preferred_element_type=jnp.float32)
    y = jnp.zeros((Cout, L), jnp.float32)
    t = 0
    for kh in range(K):
        for kw in range(K):
            y = y + tap(z[t * Cout:(t + 1) * Cout, :], kh - pad, kw - pad)
            t += 1
    y = y + b2_ref[...]

    # ---- residual on the tile rows; re-read the x tile (no live f32 copy) --
    lo = halo * W
    out = (scales_ref[0] * y[:, lo:lo + tile_h * W]
           + scales_ref[1] * x_ref[0].astype(jnp.float32))
    o_ref[0] = out.astype(o_ref.dtype)


def _round8(n):
    return ((n + 7) // 8) * 8


def _build_halos(x_p, tile_h, halo):
    """Per-tile top/bottom halo rows (zeros outside the image).

    x_p: (B, C, H, W)  ->  two (B, n_tiles, C, halo*W) arrays.
    """
    B, C, H, W = x_p.shape
    n_tiles = H // tile_h
    xz = jnp.pad(x_p, ((0, 0), (0, 0), (halo, halo), (0, 0)))
    top = [xz[:, :, i * tile_h:i * tile_h + halo, :] for i in range(n_tiles)]
    bot = [xz[:, :, (i + 1) * tile_h + halo:(i + 1) * tile_h + 2 * halo, :]
           for i in range(n_tiles)]
    top = jnp.stack(top, axis=1).reshape(B, n_tiles, C, halo * W)
    bot = jnp.stack(bot, axis=1).reshape(B, n_tiles, C, halo * W)
    return top, bot


def adacnn_forward(x, w1_oihw, b1, w2_oihw, b2, res_scale, x_scale,
                   *, tile_h=None):
    """x: (B, Cin, H, W) NCHW (PyTorch convention). Returns NCHW."""
    B, Cin, H, W = x.shape
    Cmid, _, K, _ = w1_oihw.shape
    Cout = w2_oihw.shape[0]
    assert Cin == Cout, "AdaCNN residual needs Cin == Cout"
    pad = K // 2
    halo = 2 * pad
    KK = K * K

    if tile_h is None:
        # Modest tiles keep the per-step slab well under v7x's 64 MiB VMEM at
        # production widths; fall back to the whole image if nothing divides.
        tile_h = H
        for cand in (16, 8, 32, 4):
            if H % cand == 0 and cand >= halo and (cand * W) % 128 == 0:
                tile_h = cand
                break
    assert H % tile_h == 0 and tile_h >= halo
    assert (tile_h * W) % 128 == 0 or tile_h == H, "tile must be lane-aligned"
    n_tiles = H // tile_h
    rows = tile_h + 2 * halo

    # Zero-pad channels to multiples of 8 so tap writes / output stores are
    # sublane-aligned (the extra channels are exact zeros end-to-end).
    Cin_p, Cmid_p, Cout_p = _round8(Cin), _round8(Cmid), _round8(Cout)
    x_p = jnp.pad(x, ((0, 0), (0, Cin_p - Cin), (0, 0), (0, 0)))
    w1_p = jnp.pad(w1_oihw, ((0, Cmid_p - Cmid), (0, Cin_p - Cin), (0, 0), (0, 0)))
    w2_p = jnp.pad(w2_oihw, ((0, Cout_p - Cout), (0, Cmid_p - Cmid), (0, 0), (0, 0)))
    b1_col = jnp.pad(b1, (0, Cmid_p - Cmid)).reshape(Cmid_p, 1).astype(jnp.float32)
    b2_col = jnp.pad(b2, (0, Cout_p - Cout)).reshape(Cout_p, 1).astype(jnp.float32)

    # NCHW consumed directly (reshape only); halos are tiny per-tile strips.
    x_flat = x_p.reshape(B, Cin_p, H * W)
    top, bot = _build_halos(x_p, tile_h, halo)

    # conv1 weights: (Cmid, K*K*Cin) with contraction ordered (kh, kw, cin).
    w1_mat = jnp.transpose(w1_p, (0, 2, 3, 1)).reshape(Cmid_p, KK * Cin_p)
    w1_mat = w1_mat.astype(jnp.bfloat16)
    # conv2 weights: taps stacked along M -> (K*K*Cout, Cmid), group t = kh*K+kw.
    w2_stk = jnp.transpose(w2_p, (2, 3, 0, 1)).reshape(KK * Cout_p, Cmid_p)
    w2_stk = w2_stk.astype(jnp.bfloat16)
    scales = jnp.array([res_scale, x_scale], jnp.float32)

    kernel = functools.partial(adacnn_kernel, K=K, W=W, tile_h=tile_h)

    out_flat = pl.pallas_call(
        kernel,
        out_shape=jax.ShapeDtypeStruct((B, Cout_p, H * W), x.dtype),
        grid=(B, n_tiles),
        in_specs=[
            pl.BlockSpec((1, Cin_p, tile_h * W), lambda b, i: (b, 0, i)),
            pl.BlockSpec((1, 1, Cin_p, halo * W), lambda b, i: (b, i, 0, 0)),
            pl.BlockSpec((1, 1, Cin_p, halo * W), lambda b, i: (b, i, 0, 0)),
            pl.BlockSpec((Cmid_p, KK * Cin_p), lambda b, i: (0, 0)),
            pl.BlockSpec((Cmid_p, 1), lambda b, i: (0, 0)),
            pl.BlockSpec((KK * Cout_p, Cmid_p), lambda b, i: (0, 0)),
            pl.BlockSpec((Cout_p, 1), lambda b, i: (0, 0)),
            pl.BlockSpec(memory_space=pltpu.MemorySpace.SMEM),
        ],
        out_specs=pl.BlockSpec((1, Cout_p, tile_h * W), lambda b, i: (b, 0, i)),
        scratch_shapes=[
            pltpu.VMEM((Cin_p, rows * W), jnp.float32),        # x slab
            pltpu.VMEM((KK * Cin_p, rows * W), jnp.bfloat16),  # conv1 im2col
            pltpu.VMEM((Cmid_p, rows * W), jnp.bfloat16),      # relu(conv1)
        ],
        compiler_params=pltpu.CompilerParams(
            dimension_semantics=("parallel", "parallel"),
            vmem_limit_bytes=48 * 1024 * 1024),
    )(x_flat, top, bot, w1_mat, b1_col, w2_stk, b2_col, scales)

    return out_flat[:, :Cout, :].reshape(B, Cout, H, W)


def reference(x, w1_oihw, b1, w2_oihw, b2, res_scale, x_scale):
    """Pure-JAX reference with lax conv (same semantics as the PyTorch module)."""
    K = w1_oihw.shape[2]
    pad = K // 2
    dn = ("NCHW", "OIHW", "NCHW")
    h = jax.lax.conv_general_dilated(
        x, w1_oihw, (1, 1), [(pad, pad), (pad, pad)], dimension_numbers=dn)
    h = jnp.maximum(h + b1[None, :, None, None], 0.0)
    h2 = jax.lax.conv_general_dilated(
        h, w2_oihw, (1, 1), [(pad, pad), (pad, pad)], dimension_numbers=dn)
    h2 = h2 + b2[None, :, None, None]
    return res_scale * h2 + x_scale * x


def weight_norm(v):
    """PyTorch weight_norm over dim=0: w = g * v / ||v||, with g init = ||v||."""
    norm = jnp.sqrt(jnp.sum(v * v, axis=(1, 2, 3), keepdims=True))
    return norm * v / norm


if __name__ == "__main__":
    # AdaCNN(n_feats=4, kernel_size=3, expand=4); input B=2, 4 ch, 16x16.
    B, n_feats, H, W = 2, 4, 16, 16
    K, expand = 3, 4
    Cmid = n_feats * expand

    key = jax.random.PRNGKey(0)
    k1, k2, k3, k4, k5 = jax.random.split(key, 5)
    x = jax.random.normal(k1, (B, n_feats, H, W), jnp.float32)
    v1 = jax.random.normal(k2, (Cmid, n_feats, K, K), jnp.float32) * 0.1
    b1 = jax.random.normal(k3, (Cmid,), jnp.float32) * 0.1
    v2 = jax.random.normal(k4, (n_feats, Cmid, K, K), jnp.float32) * 0.1
    b2 = jax.random.normal(k5, (n_feats,), jnp.float32) * 0.1

    w1_oihw = weight_norm(v1)
    w2_oihw = weight_norm(v2)
    res_scale, x_scale = 0.2, 1.0   # Scale(0.2), Scale(1) initial values

    # tile_h=8 -> 2 spatial tiles per image: exercises both image edges and an
    # interior tile boundary (real-halo path) at the toy size.
    out = adacnn_forward(x, w1_oihw, b1, w2_oihw, b2, res_scale, x_scale,
                         tile_h=8)
    out = jax.block_until_ready(out)

    ref = reference(x, w1_oihw, b1, w2_oihw, b2, res_scale, x_scale)
    assert out.shape == x.shape, (out.shape, x.shape)
    max_err = float(jnp.max(jnp.abs(out - ref)))
    # bf16 im2col / activations (f32 accumulation) vs an all-f32 reference.
    assert max_err < 3e-2, max_err

    print("KERNEL_OK")
</pallas_src>

<mosaic_0001>
module attributes {stable_mosaic.version = 11 : i64} {
  func.func @adacnn_kernel(%arg0: i32, %arg1: i32, %arg2: memref<1x8x128xf32, #tpu.memory_space<vmem>>, %arg3: memref<1x1x8x32xf32, #tpu.memory_space<vmem>>, %arg4: memref<1x1x8x32xf32, #tpu.memory_space<vmem>>, %arg5: memref<16x72xbf16, #tpu.memory_space<vmem>>, %arg6: memref<16x1xf32, #tpu.memory_space<vmem>>, %arg7: memref<72x16xbf16, #tpu.memory_space<vmem>>, %arg8: memref<8x1xf32, #tpu.memory_space<vmem>>, %arg9: memref<2xf32, #tpu.memory_space<smem>>, %arg10: memref<1x8x128xf32, #tpu.memory_space<vmem>>, %arg11: memref<8x192xf32, #tpu.memory_space<vmem>>, %arg12: memref<72x192xbf16, #tpu.memory_space<vmem>>, %arg13: memref<16x192xbf16, #tpu.memory_space<vmem>>) attributes {dimension_semantics = [#tpu.dimension_semantics<parallel>, #tpu.dimension_semantics<parallel>], iteration_bounds = array<i64: 2, 2>, scalar_prefetch = 0 : i64, scratch_operands = 3 : i64, tpu.core_type = #tpu.core_type<tc>, window_params = [{transform_indices = @transform_0, window_bounds = array<i64: 1, 8, 128>}, {transform_indices = @transform_1, window_bounds = array<i64: 1, 1, 8, 32>}, {transform_indices = @transform_2, window_bounds = array<i64: 1, 1, 8, 32>}, {pipeline_mode = #tpu.pipeline_mode<synchronous>, transform_indices = @transform_3, window_bounds = array<i64: 16, 72>}, {pipeline_mode = #tpu.pipeline_mode<synchronous>, transform_indices = @transform_4, window_bounds = array<i64: 16, 1>}, {pipeline_mode = #tpu.pipeline_mode<synchronous>, transform_indices = @transform_5, window_bounds = array<i64: 72, 16>}, {pipeline_mode = #tpu.pipeline_mode<synchronous>, transform_indices = @transform_6, window_bounds = array<i64: 8, 1>}, {transform_indices = @transform_7, window_bounds = array<i64: 2>}, {transform_indices = @transform_8, window_bounds = array<i64: 1, 8, 128>}]} {
    %0 = tpu.iota {dimensions = array<i32: 1>} : vector<1x192xi32>
    %c16_i32 = arith.constant 16 : i32
    %c0_i32 = arith.constant 0 : i32
    %1 = arith.cmpi eq, %c16_i32, %c0_i32 : i32
    %c1_i32 = arith.constant 1 : i32
    %2 = arith.select %1, %c1_i32, %c16_i32 : i32
    %3 = vector.broadcast %2 : i32 to vector<1x192xi32>
    %4 = arith.remsi %0, %3 : vector<1x192xi32>
    %c0_i32_0 = arith.constant 0 : i32
    %5 = vector.broadcast %c0_i32_0 : i32 to vector<1x192xi32>
    %6 = arith.cmpi ne, %4, %5 : vector<1x192xi32>
    %c0_i32_1 = arith.constant 0 : i32
    %7 = vector.broadcast %c0_i32_1 : i32 to vector<1x192xi32>
    %8 = arith.cmpi slt, %4, %7 : vector<1x192xi32>
    %c0_i32_2 = arith.constant 0 : i32
    %9 = arith.cmpi slt, %2, %c0_i32_2 : i32
    %10 = vector.broadcast %9 : i1 to vector<1x192xi1>
    %11 = vector.broadcast %10 : vector<1x192xi1> to vector<1x192xi1>
    %12 = arith.xori %8, %11 : vector<1x192xi1>
    %13 = arith.andi %12, %6 : vector<1x192xi1>
    %14 = vector.broadcast %2 : i32 to vector<1x192xi32>
    %15 = arith.addi %4, %14 : vector<1x192xi32>
    %16 = arith.select %13, %15, %4 : vector<1x192xi1>, vector<1x192xi32>
    %c-1_i32 = arith.constant -1 : i32
    %17 = vector.broadcast %c-1_i32 : i32 to vector<1x192xi32>
    %18 = arith.addi %16, %17 : vector<1x192xi32>
    %c0_i32_3 = arith.constant 0 : i32
    %19 = vector.broadcast %c0_i32_3 : i32 to vector<1x192xi32>
    %20 = arith.cmpi sge, %18, %19 : vector<1x192xi32>
    %c-1_i32_4 = arith.constant -1 : i32
    %21 = vector.broadcast %c-1_i32_4 : i32 to vector<1x192xi32>
    %22 = arith.addi %16, %21 : vector<1x192xi32>
    %c16_i32_5 = arith.constant 16 : i32
    %23 = vector.broadcast %c16_i32_5 : i32 to vector<1x192xi32>
    %24 = arith.cmpi slt, %22, %23 : vector<1x192xi32>
    %25 = arith.andi %20, %24 : vector<1x192xi1>
    %26 = arith.extui %25 : vector<1x192xi1> to vector<1x192xi32>
    %27 = arith.sitofp %26 : vector<1x192xi32> to vector<1x192xf32>
    %c1_i32_6 = arith.constant 1 : i32
    %28 = vector.broadcast %c1_i32_6 : i32 to vector<1x192xi32>
    %29 = arith.addi %16, %28 : vector<1x192xi32>
    %c0_i32_7 = arith.constant 0 : i32
    %30 = vector.broadcast %c0_i32_7 : i32 to vector<1x192xi32>
    %31 = arith.cmpi sge, %29, %30 : vector<1x192xi32>
    %c1_i32_8 = arith.constant 1 : i32
    %32 = vector.broadcast %c1_i32_8 : i32 to vector<1x192xi32>
    %33 = arith.addi %16, %32 : vector<1x192xi32>
    %c16_i32_9 = arith.constant 16 : i32
    %34 = vector.broadcast %c16_i32_9 : i32 to vector<1x192xi32>
    %35 = arith.cmpi slt, %33, %34 : vector<1x192xi32>
    %36 = arith.andi %31, %35 : vector<1x192xi1>
    %37 = arith.extui %36 : vector<1x192xi1> to vector<1x192xi32>
    %38 = arith.sitofp %37 : vector<1x192xi32> to vector<1x192xf32>
    %c0 = arith.constant 0 : index
    %c0_10 = arith.constant 0 : index
    %c0_11 = arith.constant 0 : index
    %c0_12 = arith.constant 0 : index
    %39 = vector.load %arg3[%c0, %c0_10, %c0_11, %c0_12] : memref<1x1x8x32xf32, #tpu.memory_space<vmem>>, vector<1x1x8x32xf32>
    %40 = vector.shape_cast %39 : vector<1x1x8x32xf32> to vector<8x32xf32>
    %c0_13 = arith.constant 0 : index
    %c0_14 = arith.constant 0 : index
    %41 = vector.load %arg11[%c0_13, %c0_14] : memref<8x192xf32, #tpu.memory_space<vmem>>, vector<8x32xf32>
    tpu.vector_store %arg11[%c0_13, %c0_14], %40 {strides = array<i32>} : memref<8x192xf32, #tpu.memory_space<vmem>>, vector<8x32xf32>,
    %c0_15 = arith.constant 0 : index
    %c0_16 = arith.constant 0 : index
    %c0_17 = arith.constant 0 : index
    %42 = vector.load %arg2[%c0_15, %c0_16, %c0_17] : memref<1x8x128xf32, #tpu.memory_space<vmem>>, vector<1x8x128xf32>
    %43 = vector.shape_cast %42 : vector<1x8x128xf32> to vector<8x128xf32>
    %c0_18 = arith.constant 0 : index
    %c32 = arith.constant 32 : index
    %44 = vector.load %arg11[%c0_18, %c32] : memref<8x192xf32, #tpu.memory_space<vmem>>, vector<8x128xf32>
    tpu.vector_store %arg11[%c0_18, %c32], %43 {strides = array<i32>} : memref<8x192xf32, #tpu.memory_space<vmem>>, vector<8x128xf32>,
    %c0_19 = arith.constant 0 : index
    %c0_20 = arith.constant 0 : index
    %c0_21 = arith.constant 0 : index
    %c0_22 = arith.constant 0 : index
    %45 = vector.load %arg4[%c0_19, %c0_20, %c0_21, %c0_22] : memref<1x1x8x32xf32, #tpu.memory_space<vmem>>, vector<1x1x8x32xf32>
    %46 = vector.shape_cast %45 : vector<1x1x8x32xf32> to vector<8x32xf32>
    %c0_23 = arith.constant 0 : index
    %c160 = arith.constant 160 : index
    %47 = vector.load %arg11[%c0_23, %c160] : memref<8x192xf32, #tpu.memory_space<vmem>>, vector<8x32xf32>
    tpu.vector_store %arg11[%c0_23, %c160], %46 {strides = array<i32>} : memref<8x192xf32, #tpu.memory_space<vmem>>, vector<8x32xf32>,
    %c0_24 = arith.constant 0 : index
    %c0_25 = arith.constant 0 : index
    %48 = vector.load %arg11[%c0_24, %c0_25] : memref<8x192xf32, #tpu.memory_space<vmem>>, vector<8x192xf32>
    %49 = vector.extract_strided_slice %48 {offsets = [0, 175], sizes = [8, 17], strides = [1, 1]} : vector<8x192xf32> to vector<8x17xf32>
    %50 = vector.extract_strided_slice %48 {offsets = [0, 0], sizes = [8, 175], strides = [1, 1]} : vector<8x192xf32> to vector<8x175xf32>
    %51 = tpu.concatenate %49, %50 in 1 : vector<8x17xf32>, vector<8x175xf32> -> vector<8x192xf32>
    %52 = vector.broadcast %27 : vector<1x192xf32> to vector<8x192xf32>
    %53 = arith.mulf %51, %52 : vector<8x192xf32>
    %54 = arith.truncf %53 : vector<8x192xf32> to vector<8x192xbf16>
    %c0_26 = arith.constant 0 : index
    %c0_27 = arith.constant 0 : index
    %55 = vector.load %arg12[%c0_26, %c0_27] : memref<72x192xbf16, #tpu.memory_space<vmem>>, vector<8x192xbf16>
    tpu.vector_store %arg12[%c0_26, %c0_27], %54 {strides = array<i32>} : memref<72x192xbf16, #tpu.memory_space<vmem>>, vector<8x192xbf16>,
    %56 = vector.extract_strided_slice %48 {offsets = [0, 176], sizes = [8, 16], strides = [1, 1]} : vector<8x192xf32> to vector<8x16xf32>
    %57 = vector.extract_strided_slice %48 {offsets = [0, 0], sizes = [8, 176], strides = [1, 1]} : vector<8x192xf32> to vector<8x176xf32>
    %58 = tpu.concatenate %56, %57 in 1 : vector<8x16xf32>, vector<8x176xf32> -> vector<8x192xf32>
    %59 = arith.truncf %58 : vector<8x192xf32> to vector<8x192xbf16>
    %c8 = arith.constant 8 : index
    %c0_28 = arith.constant 0 : index
    %60 = vector.load %arg12[%c8, %c0_28] : memref<72x192xbf16, #tpu.memory_space<vmem>>, vector<8x192xbf16>
    tpu.vector_store %arg12[%c8, %c0_28], %59 {strides = array<i32>} : memref<72x192xbf16, #tpu.memory_space<vmem>>, vector<8x192xbf16>,
    %61 = vector.extract_strided_slice %48 {offsets = [0, 177], sizes = [8, 15], strides = [1, 1]} : vector<8x192xf32> to vector<8x15xf32>
    %62 = vector.extract_strided_slice %48 {offsets = [0, 0], sizes = [8, 177], strides = [1, 1]} : vector<8x192xf32> to vector<8x177xf32>
    %63 = tpu.concatenate %61, %62 in 1 : vector<8x15xf32>, vector<8x177xf32> -> vector<8x192xf32>
    %64 = vector.broadcast %38 : vector<1x192xf32> to vector<8x192xf32>
    %65 = arith.mulf %63, %64 : vector<8x192xf32>
    %66 = arith.truncf %65 : vector<8x192xf32> to vector<8x192xbf16>
    %c16 = arith.constant 16 : index
    %c0_29 = arith.constant 0 : index
    %67 = vector.load %arg12[%c16, %c0_29] : memref<72x192xbf16, #tpu.memory_space<vmem>>, vector<8x192xbf16>
    tpu.vector_store %arg12[%c16, %c0_29], %66 {strides = array<i32>} : memref<72x192xbf16, #tpu.memory_space<vmem>>, vector<8x192xbf16>,
    %68 = vector.extract_strided_slice %48 {offsets = [0, 191], sizes = [8, 1], strides = [1, 1]} : vector<8x192xf32> to vector<8x1xf32>
    %69 = vector.extract_strided_slice %48 {offsets = [0, 0], sizes = [8, 191], strides = [1, 1]} : vector<8x192xf32> to vector<8x191xf32>
    %70 = tpu.concatenate %68, %69 in 1 : vector<8x1xf32>, vector<8x191xf32> -> vector<8x192xf32>
    %71 = vector.broadcast %27 : vector<1x192xf32> to vector<8x192xf32>
    %72 = arith.mulf %70, %71 : vector<8x192xf32>
    %73 = arith.truncf %72 : vector<8x192xf32> to vector<8x192xbf16>
    %c24 = arith.constant 24 : index
    %c0_30 = arith.constant 0 : index
    %74 = vector.load %arg12[%c24, %c0_30] : memref<72x192xbf16, #tpu.memory_space<vmem>>, vector<8x192xbf16>
    tpu.vector_store %arg12[%c24, %c0_30], %73 {strides = array<i32>} : memref<72x192xbf16, #tpu.memory_space<vmem>>, vector<8x192xbf16>,
    %75 = arith.truncf %48 : vector<8x192xf32> to vector<8x192xbf16>
    %c32_31 = arith.constant 32 : index
    %c0_32 = arith.constant 0 : index
    %76 = vector.load %arg12[%c32_31, %c0_32] : memref<72x192xbf16, #tpu.memory_space<vmem>>, vector<8x192xbf16>
    tpu.vector_store %arg12[%c32_31, %c0_32], %75 {strides = array<i32>} : memref<72x192xbf16, #tpu.memory_space<vmem>>, vector<8x192xbf16>,
    %77 = vector.extract_strided_slice %48 {offsets = [0, 1], sizes = [8, 191], strides = [1, 1]} : vector<8x192xf32> to vector<8x191xf32>
    %78 = vector.extract_strided_slice %48 {offsets = [0, 0], sizes = [8, 1], strides = [1, 1]} : vector<8x192xf32> to vector<8x1xf32>
    %79 = tpu.concatenate %77, %78 in 1 : vector<8x191xf32>, vector<8x1xf32> -> vector<8x192xf32>
    %80 = vector.broadcast %38 : vector<1x192xf32> to vector<8x192xf32>
    %81 = arith.mulf %79, %80 : vector<8x192xf32>
    %82 = arith.truncf %81 : vector<8x192xf32> to vector<8x192xbf16>
    %c40 = arith.constant 40 : index
    %c0_33 = arith.constant 0 : index
    %83 = vector.load %arg12[%c40, %c0_33] : memref<72x192xbf16, #tpu.memory_space<vmem>>, vector<8x192xbf16>
    tpu.vector_store %arg12[%c40, %c0_33], %82 {strides = array<i32>} : memref<72x192xbf16, #tpu.memory_space<vmem>>, vector<8x192xbf16>,
    %84 = vector.extract_strided_slice %48 {offsets = [0, 15], sizes = [8, 177], strides = [1, 1]} : vector<8x192xf32> to vector<8x177xf32>
    %85 = vector.extract_strided_slice %48 {offsets = [0, 0], sizes = [8, 15], strides = [1, 1]} : vector<8x192xf32> to vector<8x15xf32>
    %86 = tpu.concatenate %84, %85 in 1 : vector<8x177xf32>, vector<8x15xf32> -> vector<8x192xf32>
    %87 = vector.broadcast %27 : vector<1x192xf32> to vector<8x192xf32>
    %88 = arith.mulf %86, %87 : vector<8x192xf32>
    %89 = arith.truncf %88 : vector<8x192xf32> to vector<8x192xbf16>
    %c48 = arith.constant 48 : index
    %c0_34 = arith.constant 0 : index
    %90 = vector.load %arg12[%c48, %c0_34] : memref<72x192xbf16, #tpu.memory_space<vmem>>, vector<8x192xbf16>
    tpu.vector_store %arg12[%c48, %c0_34], %89 {strides = array<i32>} : memref<72x192xbf16, #tpu.memory_space<vmem>>, vector<8x192xbf16>,
    %91 = vector.extract_strided_slice %48 {offsets = [0, 16], sizes = [8, 176], strides = [1, 1]} : vector<8x192xf32> to vector<8x176xf32>
    %92 = vector.extract_strided_slice %48 {offsets = [0, 0], sizes = [8, 16], strides = [1, 1]} : vector<8x192xf32> to vector<8x16xf32>
    %93 = tpu.concatenate %91, %92 in 1 : vector<8x176xf32>, vector<8x16xf32> -> vector<8x192xf32>
    %94 = arith.truncf %93 : vector<8x192xf32> to vector<8x192xbf16>
    %c56 = arith.constant 56 : index
    %c0_35 = arith.constant 0 : index
    %95 = vector.load %arg12[%c56, %c0_35] : memref<72x192xbf16, #tpu.memory_space<vmem>>, vector<8x192xbf16>
    tpu.vector_store %arg12[%c56, %c0_35], %94 {strides = array<i32>} : memref<72x192xbf16, #tpu.memory_space<vmem>>, vector<8x192xbf16>,
    %96 = vector.extract_strided_slice %48 {offsets = [0, 17], sizes = [8, 175], strides = [1, 1]} : vector<8x192xf32> to vector<8x175xf32>
    %97 = vector.extract_strided_slice %48 {offsets = [0, 0], sizes = [8, 17], strides = [1, 1]} : vector<8x192xf32> to vector<8x17xf32>
    %98 = tpu.concatenate %96, %97 in 1 : vector<8x175xf32>, vector<8x17xf32> -> vector<8x192xf32>
    %99 = vector.broadcast %38 : vector<1x192xf32> to vector<8x192xf32>
    %100 = arith.mulf %98, %99 : vector<8x192xf32>
    %101 = arith.truncf %100 : vector<8x192xf32> to vector<8x192xbf16>
    %c64 = arith.constant 64 : index
    %c0_36 = arith.constant 0 : index
    %102 = vector.load %arg12[%c64, %c0_36] : memref<72x192xbf16, #tpu.memory_space<vmem>>, vector<8x192xbf16>
    tpu.vector_store %arg12[%c64, %c0_36], %101 {strides = array<i32>} : memref<72x192xbf16, #tpu.memory_space<vmem>>, vector<8x192xbf16>,
    %c0_37 = arith.constant 0 : index
    %c0_38 = arith.constant 0 : index
    %103 = vector.load %arg5[%c0_37, %c0_38] : memref<16x72xbf16, #tpu.memory_space<vmem>>, vector<16x72xbf16>
    %c0_39 = arith.constant 0 : index
    %c0_40 = arith.constant 0 : index
    %104 = vector.load %arg12[%c0_39, %c0_40] : memref<72x192xbf16, #tpu.memory_space<vmem>>, vector<72x192xbf16>
    %cst = arith.constant dense<0.000000e+00> : vector<16x192xf32>
    %105 = tpu.matmul %103, %104, %cst {dimension_numbers = #tpu.dot_dimension_numbers<[1], [0], [0], [1], [0, 0, 1, 1], [], []>} : vector<16x72xbf16>, vector<72x192xbf16>, vector<16x192xf32> -> vector<16x192xf32>
    %c0_41 = arith.constant 0 : index
    %c0_42 = arith.constant 0 : index
    %106 = vector.load %arg6[%c0_41, %c0_42] : memref<16x1xf32, #tpu.memory_space<vmem>>, vector<16x1xf32>
    %107 = vector.broadcast %106 : vector<16x1xf32> to vector<16x192xf32>
    %108 = arith.addf %105, %107 : vector<16x192xf32>
    %cst_43 = arith.constant 0.000000e+00 : f32
    %109 = vector.broadcast %cst_43 : f32 to vector<16x192xf32>
    %110 = arith.maximumf %108, %109 : vector<16x192xf32>
    %111 = arith.truncf %110 : vector<16x192xf32> to vector<16x192xbf16>
    %c0_44 = arith.constant 0 : index
    %c0_45 = arith.constant 0 : index
    %112 = vector.load %arg13[%c0_44, %c0_45] : memref<16x192xbf16, #tpu.memory_space<vmem>>, vector<16x192xbf16>
    tpu.vector_store %arg13[%c0_44, %c0_45], %111 {strides = array<i32>} : memref<16x192xbf16, #tpu.memory_space<vmem>>, vector<16x192xbf16>,
    %c0_i32_46 = arith.constant 0 : i32
    %113 = arith.cmpi eq, %arg1, %c0_i32_46 : i32
    %114 = arith.extui %113 : i1 to i32
    %c0_i32_47 = arith.constant 0 : i32
    %115 = arith.cmpi ne, %114, %c0_i32_47 : i32
    scf.if %115 {
      %cst_65 = arith.constant 0.000000e+00 : bf16
      %193 = vector.broadcast %cst_65 : bf16 to vector<16x16xbf16>
      %c0_66 = arith.constant 0 : index
      %c16_67 = arith.constant 16 : index
      %194 = vector.load %arg13[%c0_66, %c16_67] : memref<16x192xbf16, #tpu.memory_space<vmem>>, vector<16x16xbf16>
      tpu.vector_store %arg13[%c0_66, %c16_67], %193 {strides = array<i32>} : memref<16x192xbf16, #tpu.memory_space<vmem>>, vector<16x16xbf16>,
    } else {
    }
    %c1_i32_48 = arith.constant 1 : i32
    %116 = arith.cmpi eq, %arg1, %c1_i32_48 : i32
    %117 = arith.extui %116 : i1 to i32
    %c0_i32_49 = arith.constant 0 : i32
    %118 = arith.cmpi ne, %117, %c0_i32_49 : i32
    scf.if %118 {
      %cst_65 = arith.constant 0.000000e+00 : bf16
      %193 = vector.broadcast %cst_65 : bf16 to vector<16x16xbf16>
      %c0_66 = arith.constant 0 : index
      %c160_67 = arith.constant 160 : index
      %194 = vector.load %arg13[%c0_66, %c160_67] : memref<16x192xbf16, #tpu.memory_space<vmem>>, vector<16x16xbf16>
      tpu.vector_store %arg13[%c0_66, %c160_67], %193 {strides = array<i32>} : memref<16x192xbf16, #tpu.memory_space<vmem>>, vector<16x16xbf16>,
    } else {
    }
    %c0_50 = arith.constant 0 : index
    %c0_51 = arith.constant 0 : index
    %119 = vector.load %arg7[%c0_50, %c0_51] : memref<72x16xbf16, #tpu.memory_space<vmem>>, vector<72x16xbf16>
    %c0_52 = arith.constant 0 : index
    %c0_53 = arith.constant 0 : index
    %120 = vector.load %arg13[%c0_52, %c0_53] : memref<16x192xbf16, #tpu.memory_space<vmem>>, vector<16x192xbf16>
    %cst_54 = arith.constant dense<0.000000e+00> : vector<72x192xf32>
    %121 = tpu.matmul %119, %120, %cst_54 {dimension_numbers = #tpu.dot_dimension_numbers<[1], [0], [0], [1], [0, 0, 1, 1], [], []>} : vector<72x16xbf16>, vector<16x192xbf16>, vector<72x192xf32> -> vector<72x192xf32>
    %cst_55 = arith.constant 0.000000e+00 : f32
    %122 = vector.broadcast %cst_55 : f32 to vector<8x192xf32>
    %123 = vector.extract_strided_slice %121 {offsets = [0, 0], sizes = [8, 192], strides = [1, 1]} : vector<72x192xf32> to vector<8x192xf32>
    %124 = vector.extract_strided_slice %123 {offsets = [0, 175], sizes = [8, 17], strides = [1, 1]} : vector<8x192xf32> to vector<8x17xf32>
    %125 = vector.extract_strided_slice %123 {offsets = [0, 0], sizes = [8, 175], strides = [1, 1]} : vector<8x192xf32> to vector<8x175xf32>
    %126 = tpu.concatenate %124, %125 in 1 : vector<8x17xf32>, vector<8x175xf32> -> vector<8x192xf32>
    %127 = vector.broadcast %27 : vector<1x192xf32> to vector<8x192xf32>
    %128 = arith.mulf %126, %127 : vector<8x192xf32>
    %129 = arith.addf %122, %128 : vector<8x192xf32>
    %130 = vector.extract_strided_slice %121 {offsets = [8, 0], sizes = [8, 192], strides = [1, 1]} : vector<72x192xf32> to vector<8x192xf32>
    %131 = vector.extract_strided_slice %130 {offsets = [0, 176], sizes = [8, 16], strides = [1, 1]} : vector<8x192xf32> to vector<8x16xf32>
    %132 = vector.extract_strided_slice %130 {offsets = [0, 0], sizes = [8, 176], strides = [1, 1]} : vector<8x192xf32> to vector<8x176xf32>
    %133 = tpu.concatenate %131, %132 in 1 : vector<8x16xf32>, vector<8x176xf32> -> vector<8x192xf32>
    %134 = arith.addf %129, %133 : vector<8x192xf32>
    %135 = vector.extract_strided_slice %121 {offsets = [16, 0], sizes = [8, 192], strides = [1, 1]} : vector<72x192xf32> to vector<8x192xf32>
    %136 = vector.extract_strided_slice %135 {offsets = [0, 177], sizes = [8, 15], strides = [1, 1]} : vector<8x192xf32> to vector<8x15xf32>
    %137 = vector.extract_strided_slice %135 {offsets = [0, 0], sizes = [8, 177], strides = [1, 1]} : vector<8x192xf32> to vector<8x177xf32>
    %138 = tpu.concatenate %136, %137 in 1 : vector<8x15xf32>, vector<8x177xf32> -> vector<8x192xf32>
    %139 = vector.broadcast %38 : vector<1x192xf32> to vector<8x192xf32>
    %140 = arith.mulf %138, %139 : vector<8x192xf32>
    %141 = arith.addf %134, %140 : vector<8x192xf32>
    %142 = vector.extract_strided_slice %121 {offsets = [24, 0], sizes = [8, 192], strides = [1, 1]} : vector<72x192xf32> to vector<8x192xf32>
    %143 = vector.extract_strided_slice %142 {offsets = [0, 191], sizes = [8, 1], strides = [1, 1]} : vector<8x192xf32> to vector<8x1xf32>
    %144 = vector.extract_strided_slice %142 {offsets = [0, 0], sizes = [8, 191], strides = [1, 1]} : vector<8x192xf32> to vector<8x191xf32>
    %145 = tpu.concatenate %143, %144 in 1 : vector<8x1xf32>, vector<8x191xf32> -> vector<8x192xf32>
    %146 = vector.broadcast %27 : vector<1x192xf32> to vector<8x192xf32>
    %147 = arith.mulf %145, %146 : vector<8x192xf32>
    %148 = arith.addf %141, %147 : vector<8x192xf32>
    %149 = vector.extract_strided_slice %121 {offsets = [32, 0], sizes = [8, 192], strides = [1, 1]} : vector<72x192xf32> to vector<8x192xf32>
    %150 = arith.addf %148, %149 : vector<8x192xf32>
    %151 = vector.extract_strided_slice %121 {offsets = [40, 0], sizes = [8, 192], strides = [1, 1]} : vector<72x192xf32> to vector<8x192xf32>
    %152 = vector.extract_strided_slice %151 {offsets = [0, 1], sizes = [8, 191], strides = [1, 1]} : vector<8x192xf32> to vector<8x191xf32>
    %153 = vector.extract_strided_slice %151 {offsets = [0, 0], sizes = [8, 1], strides = [1, 1]} : vector<8x192xf32> to vector<8x1xf32>
    %154 = tpu.concatenate %152, %153 in 1 : vector<8x191xf32>, vector<8x1xf32> -> vector<8x192xf32>
    %155 = vector.broadcast %38 : vector<1x192xf32> to vector<8x192xf32>
    %156 = arith.mulf %154, %155 : vector<8x192xf32>
    %157 = arith.addf %150, %156 : vector<8x192xf32>
    %158 = vector.extract_strided_slice %121 {offsets = [48, 0], sizes = [8, 192], strides = [1, 1]} : vector<72x192xf32> to vector<8x192xf32>
    %159 = vector.extract_strided_slice %158 {offsets = [0, 15], sizes = [8, 177], strides = [1, 1]} : vector<8x192xf32> to vector<8x177xf32>
    %160 = vector.extract_strided_slice %158 {offsets = [0, 0], sizes = [8, 15], strides = [1, 1]} : vector<8x192xf32> to vector<8x15xf32>
    %161 = tpu.concatenate %159, %160 in 1 : vector<8x177xf32>, vector<8x15xf32> -> vector<8x192xf32>
    %162 = vector.broadcast %27 : vector<1x192xf32> to vector<8x192xf32>
    %163 = arith.mulf %161, %162 : vector<8x192xf32>
    %164 = arith.addf %157, %163 : vector<8x192xf32>
    %165 = vector.extract_strided_slice %121 {offsets = [56, 0], sizes = [8, 192], strides = [1, 1]} : vector<72x192xf32> to vector<8x192xf32>
    %166 = vector.extract_strided_slice %165 {offsets = [0, 16], sizes = [8, 176], strides = [1, 1]} : vector<8x192xf32> to vector<8x176xf32>
    %167 = vector.extract_strided_slice %165 {offsets = [0, 0], sizes = [8, 16], strides = [1, 1]} : vector<8x192xf32> to vector<8x16xf32>
    %168 = tpu.concatenate %166, %167 in 1 : vector<8x176xf32>, vector<8x16xf32> -> vector<8x192xf32>
    %169 = arith.addf %164, %168 : vector<8x192xf32>
    %170 = vector.extract_strided_slice %121 {offsets = [64, 0], sizes = [8, 192], strides = [1, 1]} : vector<72x192xf32> to vector<8x192xf32>
    %171 = vector.extract_strided_slice %170 {offsets = [0, 17], sizes = [8, 175], strides = [1, 1]} : vector<8x192xf32> to vector<8x175xf32>
    %172 = vector.extract_strided_slice %170 {offsets = [0, 0], sizes = [8, 17], strides = [1, 1]} : vector<8x192xf32> to vector<8x17xf32>
    %173 = tpu.concatenate %171, %172 in 1 : vector<8x175xf32>, vector<8x17xf32> -> vector<8x192xf32>
    %174 = vector.broadcast %38 : vector<1x192xf32> to vector<8x192xf32>
    %175 = arith.mulf %173, %174 : vector<8x192xf32>
    %176 = arith.addf %169, %175 : vector<8x192xf32>
    %c0_56 = arith.constant 0 : index
    %c0_57 = arith.constant 0 : index
    %177 = vector.load %arg8[%c0_56, %c0_57] : memref<8x1xf32, #tpu.memory_space<vmem>>, vector<8x1xf32>
    %178 = vector.broadcast %177 : vector<8x1xf32> to vector<8x192xf32>
    %179 = arith.addf %176, %178 : vector<8x192xf32>
    %c0_58 = arith.constant 0 : index
    %180 = memref.load %arg9[%c0_58] : memref<2xf32, #tpu.memory_space<smem>>
    %181 = vector.extract_strided_slice %179 {offsets = [0, 32], sizes = [8, 128], strides = [1, 1]} : vector<8x192xf32> to vector<8x128xf32>
    %182 = vector.broadcast %180 : f32 to vector<8x128xf32>
    %183 = arith.mulf %182, %181 : vector<8x128xf32>
    %c1 = arith.constant 1 : index
    %184 = memref.load %arg9[%c1] : memref<2xf32, #tpu.memory_space<smem>>
    %c0_59 = arith.constant 0 : index
    %c0_60 = arith.constant 0 : index
    %c0_61 = arith.constant 0 : index
    %185 = vector.load %arg2[%c0_59, %c0_60, %c0_61] : memref<1x8x128xf32, #tpu.memory_space<vmem>>, vector<1x8x128xf32>
    %186 = vector.shape_cast %185 : vector<1x8x128xf32> to vector<8x128xf32>
    %187 = vector.broadcast %184 : f32 to vector<8x128xf32>
    %188 = arith.mulf %187, %186 : vector<8x128xf32>
    %189 = arith.addf %183, %188 : vector<8x128xf32>
    %c0_62 = arith.constant 0 : index
    %c0_63 = arith.constant 0 : index
    %c0_64 = arith.constant 0 : index
    %190 = vector.load %arg10[%c0_62, %c0_63, %c0_64] : memref<1x8x128xf32, #tpu.memory_space<vmem>>, vector<1x8x128xf32>
    %191 = vector.shape_cast %190 : vector<1x8x128xf32> to vector<8x128xf32>
    %192 = vector.shape_cast %189 : vector<8x128xf32> to vector<1x8x128xf32>
    tpu.vector_store %arg10[%c0_62, %c0_63, %c0_64], %192 {strides = array<i32>} : memref<1x8x128xf32, #tpu.memory_space<vmem>>, vector<1x8x128xf32>,
    return
  }
  func.func @transform_0(%arg0: i32, %arg1: i32) -> (i32, i32, i32) {
    %c0_i32 = arith.constant 0 : i32
    %c0_i32_0 = arith.constant 0 : i32
    return %arg0, %c0_i32, %arg1 : i32, i32, i32
  }
  func.func @transform_1(%arg0: i32, %arg1: i32) -> (i32, i32, i32, i32) {
    %c0_i32 = arith.constant 0 : i32
    %c0_i32_0 = arith.constant 0 : i32
    %c0_i32_1 = arith.constant 0 : i32
    return %arg0, %arg1, %c0_i32, %c0_i32_0 : i32, i32, i32, i32
  }
  func.func @transform_2(%arg0: i32, %arg1: i32) -> (i32, i32, i32, i32) {
    %c0_i32 = arith.constant 0 : i32
    %c0_i32_0 = arith.constant 0 : i32
    %c0_i32_1 = arith.constant 0 : i32
    return %arg0, %arg1, %c0_i32, %c0_i32_0 : i32, i32, i32, i32
  }
  func.func @transform_3(%arg0: i32, %arg1: i32) -> (i32, i32) {
    %c0_i32 = arith.constant 0 : i32
    %c0_i32_0 = arith.constant 0 : i32
    %c0_i32_1 = arith.constant 0 : i32
    return %c0_i32, %c0_i32_0 : i32, i32
  }
  func.func @transform_4(%arg0: i32, %arg1: i32) -> (i32, i32) {
    %c0_i32 = arith.constant 0 : i32
    %c0_i32_0 = arith.constant 0 : i32
    %c0_i32_1 = arith.constant 0 : i32
    return %c0_i32, %c0_i32_0 : i32, i32
  }
  func.func @transform_5(%arg0: i32, %arg1: i32) -> (i32, i32) {
    %c0_i32 = arith.constant 0 : i32
    %c0_i32_0 = arith.constant 0 : i32
    %c0_i32_1 = arith.constant 0 : i32
    return %c0_i32, %c0_i32_0 : i32, i32
  }
  func.func @transform_6(%arg0: i32, %arg1: i32) -> (i32, i32) {
    %c0_i32 = arith.constant 0 : i32
    %c0_i32_0 = arith.constant 0 : i32
    %c0_i32_1 = arith.constant 0 : i32
    return %c0_i32, %c0_i32_0 : i32, i32
  }
  func.func @transform_7(%arg0: i32, %arg1: i32) -> i32 {
    %c0_i32 = arith.constant 0 : i32
    %c0_i32_0 = arith.constant 0 : i32
    return %c0_i32 : i32
  }
  func.func @transform_8(%arg0: i32, %arg1: i32) -> (i32, i32, i32) {
    %c0_i32 = arith.constant 0 : i32
    %c0_i32_0 = arith.constant 0 : i32
    return %arg0, %c0_i32, %arg1 : i32, i32, i32
  }
}

</mosaic_0001>

<llo_original>
// kernel: tpu_custom_call.1
$region0: #{tpu_custom_call.1}
  #allocation0 [shape = 'u32[]', space=smem, size = 0x4, offset = 0x4, fixed_abs, tag = 'smem constant byte address 0x4 - core index']
  #allocation1 [shape = 'u32[144,128]{1,0:T(1,128)}', space=vmem, size = 0x12000, scoped, tag = 'internal scratch']
  #allocation2 [shape = 'f32[8,192]{1,0:T(8,128)}', space=vmem, size = 0x2000, scoped, tag = 'scratch operand']
  #allocation3 [shape = 'bf16[72,192]{1,0:T(8,128)(2,1)}', space=vmem, size = 0x9000, scoped, tag = 'scratch operand']
  #allocation4 [shape = 'bf16[16,192]{1,0:T(16,128)(2,1)}', space=vmem, size = 0x2000, scoped, tag = 'scratch operand']
  %s0 = inlined_call_operand.vmem [shape: f32[2,8,256], index: 0, kind: input, shape index: {}]
  %s1 = inlined_call_operand.vmem [shape: f32[2,2,8,32], index: 1, kind: input, shape index: {}]
  %s2 = inlined_call_operand.hbm [shape: f32[2,2,8,32], index: 2, kind: input, shape index: {}]
  %s3 = inlined_call_operand.vmem [shape: bf16[16,72], index: 3, kind: input, shape index: {}]
  %s4 = inlined_call_operand.vmem [shape: f32[16,1], index: 4, kind: input, shape index: {}]
  %s5 = inlined_call_operand.vmem [shape: bf16[72,16], index: 5, kind: input, shape index: {}]
  %s6 = inlined_call_operand.vmem [shape: f32[8,1], index: 6, kind: input, shape index: {}]
  %s7 = inlined_call_operand.vmem [shape: f32[2], index: 7, kind: input, shape index: {}]
  %s8 = inlined_call_operand.hbm [shape: f32[2,8,256], index: 8, kind: output, shape index: {}]
  %s9 = sld [smem:[#allocation0]]
  $region81: #{tpu_custom_call.1} parent=0
    _
  %s11 = ssub.s32 1, %s9
  %s12 = scalar_select 0, %s11, %s9
  $region1: #{tpu_custom_call.1} parent=0
    #allocation5 [shape = 'u8[8192]{0}', space=vmem, size = 0x2000, scoped, tag = 'input window, operand 2']
    #allocation6 [shape = 's32[2]{0}', space=sflag, size = 0x8, scoped, tag = 'scoped memory for tpu_custom_call.1']
    #allocation7 [shape = 's32[2]{0}', space=sflag, size = 0x8, scoped, tag = 'scoped memory for tpu_custom_call.1']
    #allocation8 [shape = 's32[2]{0}', space=sflag, size = 0x8, scoped, tag = 'scoped memory for tpu_custom_call.1']
    #allocation9 [shape = 'u8[512]{0}', space=smem, size = 0x200, scoped, tag = 'input window, operand 7, single buffered']
    #allocation10 [shape = 'u8[8192]{0}', space=vmem, size = 0x2000, scoped, tag = 'output window, operand 0']
    %13 = vsyncpa [#allocation6], 0
    %s14 = scalar_lea.sflag [#allocation6], 1
    %15 = vsyncpa %s14, 0
    %16 = vsyncpa [#allocation8], 0
    %17 = vsyncpa [#allocation7], 0
    %s18 = scalar_lea.sflag [#allocation7], 1
    %19 = vsyncpa %s18, 0
    loop: start=0, step=1, limit=6
    $region2: #{tpu_custom_call.1} parent=1 // loop_pre_header
      _
    $region3: #{tpu_custom_call.1} parent=1 // loop_header
      %s21 = sphi 0, %s25
      %p22 = scmp.ge.s32.totalorder %s21, 6
      %s28 = sphi 0, %s40
      %s29 = sphi 0, %s36
      %s30 = sphi 0, %s28
      %s31 = sphi 0, %s29
      %s32 = sphi 0, %s30
      %s33 = sphi 0, %s31
      %s45 = sphi 0, %s47
      %s48 = sphi 0, %s45
      %s49 = sphi 0, %s48
      %s65 = sphi 0, %s49
      %s73 = sphi 0, %s75
      %s76 = sphi 0, %s73
      %s77 = sphi 0, %s76
      %s93 = sphi 0, %s77
      %s101 = sphi 0, %s103
      %s104 = sphi 0, %s101
      %s105 = sphi 0, %s104
      %s121 = sphi 0, %s105
      %s125 = sphi 0, %s125
      %s127 = sphi 0, %s125
      %s128 = sphi 0, %s127
      %s142 = sphi 0, %s128
      %s146 = sphi 0, %s146
      %s148 = sphi 0, %s146
      %s149 = sphi 0, %s148
      %s163 = sphi 0, %s149
      %s167 = sphi 0, %s167
      %s169 = sphi 0, %s167
      %s170 = sphi 0, %s169
      %s184 = sphi 0, %s170
      %s188 = sphi 0, %s188
      %s190 = sphi 0, %s188
      %s191 = sphi 0, %s190
      %s205 = sphi 0, %s191
      %s209 = sphi 0, %s209
      %s211 = sphi 0, %s209
      %s212 = sphi 0, %s211
      %s226 = sphi 0, %s212
      %s234 = sphi 0, %s236
      %s237 = sphi 0, %s234
      %s238 = sphi 0, %s237
      %s254 = sphi 0, %s238
    $region4: #{tpu_custom_call.1} parent=1 // loop_header_branch
      %24 = sbr.rel (%p22) target = $region8
    $region5: #{tpu_custom_call.1} parent=1 // loop_body
      %s26 = ssub.s32 %s21, 1
      %s27 = ssub.s32 %s21, 2
      %s34 = sadd.s32 1, %s29
      %p35 = scmp.ge.s32.totalorder %s34, 2
      %s36 = scalar_select %p35, 0, %s34
      %s37 = sadd.s32 1, %s28
      %s38 = scalar_select %p35, %s37, %s28
      %p39 = scmp.ge.s32.totalorder %s38, 2
      %s40 = scalar_select %p39, 0, %s38
      %s41 = ssub.s32 %s28, %s40
      %s42 = ssub.s32 %s29, %s36
      %s43 = sor.u32 %s41, %s42
      %p44 = scmp.eq.s32.totalorder %s43, 0
      %s46 = sadd.s32 %s45, 1
      %s47 = scalar_select %p44, %s45, %s46
      %p50 = pneg %p44
      %p51 = scmp.eq.s32.totalorder %s21, 3
      %p52 = por %p50, %p51
      %p53 = scmp.ne.s32.totalorder %s45, %s48
      %p54 = scmp.eq.s32.totalorder %s21, 0
      %p55 = por %p53, %p54
      %p56 = scmp.ne.s32.totalorder %s45, %s48
      %p57 = scmp.eq.s32.totalorder %s26, 3
      %p58 = por %p56, %p57
      %p59 = scmp.ne.s32.totalorder %s48, %s49
      %p60 = scmp.eq.s32.totalorder %s26, 0
      %p61 = por %p59, %p60
      %p62 = scmp.ne.s32.totalorder %s48, %s49
      %p63 = scmp.eq.s32.totalorder %s27, 3
      %p64 = por %p62, %p63
      %p66 = scmp.ne.s32.totalorder %s49, %s65
      %p67 = scmp.eq.s32.totalorder %s27, 0
      %p68 = por %p66, %p67
      %s69 = ssub.s32 %s28, %s40
      %s70 = ssub.s32 %s29, %s36
      %s71 = sor.u32 %s69, %s70
      %p72 = scmp.eq.s32.totalorder %s71, 0
      %s74 = sadd.s32 %s73, 1
      %s75 = scalar_select %p72, %s73, %s74
      %p78 = pneg %p72
      %p79 = scmp.eq.s32.totalorder %s21, 3
      %p80 = por %p78, %p79
      %p81 = scmp.ne.s32.totalorder %s73, %s76
      %p82 = scmp.eq.s32.totalorder %s21, 0
      %p83 = por %p81, %p82
      %p84 = scmp.ne.s32.totalorder %s73, %s76
      %p85 = scmp.eq.s32.totalorder %s26, 3
      %p86 = por %p84, %p85
      %p87 = scmp.ne.s32.totalorder %s76, %s77
      %p88 = scmp.eq.s32.totalorder %s26, 0
      %p89 = por %p87, %p88
      %p90 = scmp.ne.s32.totalorder %s76, %s77
      %p91 = scmp.eq.s32.totalorder %s27, 3
      %p92 = por %p90, %p91
      %p94 = scmp.ne.s32.totalorder %s77, %s93
      %p95 = scmp.eq.s32.totalorder %s27, 0
      %p96 = por %p94, %p95
      %s97 = ssub.s32 %s28, %s40
      %s98 = ssub.s32 %s29, %s36
      %s99 = sor.u32 %s97, %s98
      %p100 = scmp.eq.s32.totalorder %s99, 0
      %s102 = sadd.s32 %s101, 1
      %s103 = scalar_select %p100, %s101, %s102
      %p106 = pneg %p100
      %p107 = scmp.eq.s32.totalorder %s21, 3
      %p108 = por %p106, %p107
      %p109 = scmp.ne.s32.totalorder %s101, %s104
      %p110 = scmp.eq.s32.totalorder %s21, 0
      %p111 = por %p109, %p110
      %p112 = scmp.ne.s32.totalorder %s101, %s104
      %p113 = scmp.eq.s32.totalorder %s26, 3
      %p114 = por %p112, %p113
      %p115 = scmp.ne.s32.totalorder %s104, %s105
      %p116 = scmp.eq.s32.totalorder %s26, 0
      %p117 = por %p115, %p116
      %p118 = scmp.ne.s32.totalorder %s104, %s105
      %p119 = scmp.eq.s32.totalorder %s27, 3
      %p120 = por %p118, %p119
      %p122 = scmp.ne.s32.totalorder %s105, %s121
      %p123 = scmp.eq.s32.totalorder %s27, 0
      %p124 = por %p122, %p123
      %s126 = sadd.s32 %s125, 1
      %p129 = scmp.eq.s32.totalorder %s21, 3
      %p130 = scmp.ne.s32.totalorder %s125, %s127
      %p131 = scmp.eq.s32.totalorder %s21, 0
      %p132 = por %p130, %p131
      %p133 = scmp.ne.s32.totalorder %s125, %s127
      %p134 = scmp.eq.s32.totalorder %s26, 3
      %p135 = por %p133, %p134
      %p136 = scmp.ne.s32.totalorder %s127, %s128
      %p137 = scmp.eq.s32.totalorder %s26, 0
      %p138 = por %p136, %p137
      %p139 = scmp.ne.s32.totalorder %s127, %s128
      %p140 = scmp.eq.s32.totalorder %s27, 3
      %p141 = por %p139, %p140
      %p143 = scmp.ne.s32.totalorder %s128, %s142
      %p144 = scmp.eq.s32.totalorder %s27, 0
      %p145 = por %p143, %p144
      %s147 = sadd.s32 %s146, 1
      %p150 = scmp.eq.s32.totalorder %s21, 3
      %p151 = scmp.ne.s32.totalorder %s146, %s148
      %p152 = scmp.eq.s32.totalorder %s21, 0
      %p153 = por %p151, %p152
      %p154 = scmp.ne.s32.totalorder %s146, %s148
      %p155 = scmp.eq.s32.totalorder %s26, 3
      %p156 = por %p154, %p155
      %p157 = scmp.ne.s32.totalorder %s148, %s149
      %p158 = scmp.eq.s32.totalorder %s26, 0
      %p159 = por %p157, %p158
      %p160 = scmp.ne.s32.totalorder %s148, %s149
      %p161 = scmp.eq.s32.totalorder %s27, 3
      %p162 = por %p160, %p161
      %p164 = scmp.ne.s32.totalorder %s149, %s163
      %p165 = scmp.eq.s32.totalorder %s27, 0
      %p166 = por %p164, %p165
      %s168 = sadd.s32 %s167, 1
      %p171 = scmp.eq.s32.totalorder %s21, 3
      %p172 = scmp.ne.s32.totalorder %s167, %s169
      %p173 = scmp.eq.s32.totalorder %s21, 0
      %p174 = por %p172, %p173
      %p175 = scmp.ne.s32.totalorder %s167, %s169
      %p176 = scmp.eq.s32.totalorder %s26, 3
      %p177 = por %p175, %p176
      %p178 = scmp.ne.s32.totalorder %s169, %s170
      %p179 = scmp.eq.s32.totalorder %s26, 0
      %p180 = por %p178, %p179
      %p181 = scmp.ne.s32.totalorder %s169, %s170
      %p182 = scmp.eq.s32.totalorder %s27, 3
      %p183 = por %p181, %p182
      %p185 = scmp.ne.s32.totalorder %s170, %s184
      %p186 = scmp.eq.s32.totalorder %s27, 0
      %p187 = por %p185, %p186
      %s189 = sadd.s32 %s188, 1
      %p192 = scmp.eq.s32.totalorder %s21, 3
      %p193 = scmp.ne.s32.totalorder %s188, %s190
      %p194 = scmp.eq.s32.totalorder %s21, 0
      %p195 = por %p193, %p194
      %p196 = scmp.ne.s32.totalorder %s188, %s190
      %p197 = scmp.eq.s32.totalorder %s26, 3
      %p198 = por %p196, %p197
      %p199 = scmp.ne.s32.totalorder %s190, %s191
      %p200 = scmp.eq.s32.totalorder %s26, 0
      %p201 = por %p199, %p200
      %p202 = scmp.ne.s32.totalorder %s190, %s191
      %p203 = scmp.eq.s32.totalorder %s27, 3
      %p204 = por %p202, %p203
      %p206 = scmp.ne.s32.totalorder %s191, %s205
      %p207 = scmp.eq.s32.totalorder %s27, 0
      %p208 = por %p206, %p207
      %s210 = sadd.s32 %s209, 1
      %p213 = scmp.eq.s32.totalorder %s21, 3
      %p214 = scmp.ne.s32.totalorder %s209, %s211
      %p215 = scmp.eq.s32.totalorder %s21, 0
      %p216 = por %p214, %p215
      %p217 = scmp.ne.s32.totalorder %s209, %s211
      %p218 = scmp.eq.s32.totalorder %s26, 3
      %p219 = por %p217, %p218
      %p220 = scmp.ne.s32.totalorder %s211, %s212
      %p221 = scmp.eq.s32.totalorder %s26, 0
      %p222 = por %p220, %p221
      %p223 = scmp.ne.s32.totalorder %s211, %s212
      %p224 = scmp.eq.s32.totalorder %s27, 3
      %p225 = por %p223, %p224
      %p227 = scmp.ne.s32.totalorder %s212, %s226
      %p228 = scmp.eq.s32.totalorder %s27, 0
      %p229 = por %p227, %p228
      %s230 = ssub.s32 %s28, %s40
      %s231 = ssub.s32 %s29, %s36
      %s232 = sor.u32 %s230, %s231
      %p233 = scmp.eq.s32.totalorder %s232, 0
      %s235 = sadd.s32 %s234, 1
      %s236 = scalar_select %p233, %s234, %s235
      %p239 = pneg %p233
      %p240 = scmp.eq.s32.totalorder %s21, 3
      %p241 = por %p239, %p240
      %p242 = scmp.ne.s32.totalorder %s234, %s237
      %p243 = scmp.eq.s32.totalorder %s21, 0
      %p244 = por %p242, %p243
      %p245 = scmp.ne.s32.totalorder %s234, %s237
      %p246 = scmp.eq.s32.totalorder %s26, 3
      %p247 = por %p245, %p246
      %p248 = scmp.ne.s32.totalorder %s237, %s238
      %p249 = scmp.eq.s32.totalorder %s26, 0
      %p250 = por %p248, %p249
      %p251 = scmp.ne.s32.totalorder %s237, %s238
      %p252 = scmp.eq.s32.totalorder %s27, 3
      %p253 = por %p251, %p252
      %p255 = scmp.ne.s32.totalorder %s238, %s254
      %p256 = scmp.eq.s32.totalorder %s27, 0
      %p257 = por %p255, %p256
      %p258 = scmp.le.s32.totalorder 1, %s21
      %p259 = scmp.lt.s32.totalorder %s21, 5
      %p260 = pnand %p258, %p259
      %p261 = pneg %p260
      // Predicated region
      $region9: #{tpu_custom_call.1} parent=5 // pred_check
        _
      $region10: #{tpu_custom_call.1} parent=5 // pred_check_branch
        %263 = sbr.rel (%p260) target = $region12
      $region11: #{tpu_custom_call.1} parent=5 // pred_region
        %s264 = ssub.s32 %s21, 1
        // Predicated region
        $region13: #{tpu_custom_call.1} parent=11 // pred_check
          %p265 = pneg %p138
        $region14: #{tpu_custom_call.1} parent=11 // pred_check_branch
          %267 = sbr.rel (%p265) target = $region16
        $region15: #{tpu_custom_call.1} parent=11 // pred_region
          _
        $region16: #{tpu_custom_call.1} parent=11 // pred_fallthru
          _
        // Predicated region
        $region17: #{tpu_custom_call.1} parent=11 // pred_check
          %p268 = pneg %p159
        $region18: #{tpu_custom_call.1} parent=11 // pred_check_branch
          %270 = sbr.rel (%p268) target = $region20
        $region19: #{tpu_custom_call.1} parent=11 // pred_region
          _
        $region20: #{tpu_custom_call.1} parent=11 // pred_fallthru
          _
        // Predicated region
        $region21: #{tpu_custom_call.1} parent=11 // pred_check
          %p271 = pneg %p180
        $region22: #{tpu_custom_call.1} parent=11 // pred_check_branch
          %273 = sbr.rel (%p271) target = $region24
        $region23: #{tpu_custom_call.1} parent=11 // pred_region
          _
        $region24: #{tpu_custom_call.1} parent=11 // pred_fallthru
          _
        // Predicated region
        $region25: #{tpu_custom_call.1} parent=11 // pred_check
          %p274 = pneg %p201
        $region26: #{tpu_custom_call.1} parent=11 // pred_check_branch
          %276 = sbr.rel (%p274) target = $region28
        $region27: #{tpu_custom_call.1} parent=11 // pred_region
          _
        $region28: #{tpu_custom_call.1} parent=11 // pred_fallthru
          _
        // Predicated region
        $region29: #{tpu_custom_call.1} parent=11 // pred_check
          %p277 = pneg %p222
        $region30: #{tpu_custom_call.1} parent=11 // pred_check_branch
          %279 = sbr.rel (%p277) target = $region32
        $region31: #{tpu_custom_call.1} parent=11 // pred_region
          %s281 = ssub.s32 16, 16
          %282 = vsyncadd [#allocation8], %s281
          %s284 = sshll.u32 %s7, 4
          %s285 = int_to_ptr.vmem [resolvable:$true] %s284
          %287 = dma.vmem_to_smem %s285, 16, [#allocation9], [#allocation8]
        $region32: #{tpu_custom_call.1} parent=11 // pred_fallthru
          _
      $region12: #{tpu_custom_call.1} parent=5 // pred_fallthru
        _
      %p288 = scmp.lt.s32.totalorder %s21, 4
      // Predicated region
      $region33: #{tpu_custom_call.1} parent=5 // pred_check
        %p289 = pneg %p288
      $region34: #{tpu_custom_call.1} parent=5 // pred_check_branch
        %291 = sbr.rel (%p289) target = $region36
      $region35: #{tpu_custom_call.1} parent=5 // pred_region
        // Predicated region
        $region37: #{tpu_custom_call.1} parent=35 // pred_check
          %p292 = pneg %p55
        $region38: #{tpu_custom_call.1} parent=35 // pred_check_branch
          %294 = sbr.rel (%p292) target = $region40
        $region39: #{tpu_custom_call.1} parent=35 // pred_region
          %p295 = scmp.lt.s32.totalorder %s28, 1
          %s296 = scalar_select %p295, %s28, 1
          %p297 = scmp.lt.s32.totalorder %s29, 1
          %s298 = scalar_select %p297, %s29, 1
          %s299 = smul.addr %s296, 2
          %s300 = sadd.s32 %s298, %s299
          %s301 = smul.addr %s300, 8
          %s302 = scalar_lea.vmem %s0, %s301
        $region40: #{tpu_custom_call.1} parent=35 // pred_fallthru
          _
        // Predicated region
        $region41: #{tpu_custom_call.1} parent=35 // pred_check
          %p303 = pneg %p83
        $region42: #{tpu_custom_call.1} parent=35 // pred_check_branch
          %305 = sbr.rel (%p303) target = $region44
        $region43: #{tpu_custom_call.1} parent=35 // pred_region
          %p306 = scmp.lt.s32.totalorder %s28, 1
          %s307 = scalar_select %p306, %s28, 1
          %p308 = scmp.lt.s32.totalorder %s29, 1
          %s309 = scalar_select %p308, %s29, 1
          %s310 = smul.addr %s307, 2
          %s311 = sadd.s32 %s309, %s310
          %s312 = smul.addr %s311, 8
          %s313 = scalar_lea.vmem %s1, %s312
        $region44: #{tpu_custom_call.1} parent=35 // pred_fallthru
          _
        // Predicated region
        $region45: #{tpu_custom_call.1} parent=35 // pred_check
          %p314 = pneg %p111
        $region46: #{tpu_custom_call.1} parent=35 // pred_check_branch
          %316 = sbr.rel (%p314) target = $region48
        $region47: #{tpu_custom_call.1} parent=35 // pred_region
          %s317 = sand.u32 %s101, 1
          %s318 = scalar_lea.sflag [#allocation6], %s317
          %s319 = sand.u32 %s101, 1
          %s320 = smul.addr %s319, 8
          %s321 = scalar_lea.vmem [#allocation5], %s320
          %s323 = ssub.s32 128, 128
          %324 = vsyncadd %s318, %s323
          %s325 = smul.addr %s28, 2
          %s326 = sadd.s32 %s29, %s325
          %s327 = smul.addr %s326, 128
          %s328 = scalar_lea.hbm %s2, %s327
          %s330 = sshll.u32 %s321, 4
          %s331 = int_to_ptr.vmem [resolvable:$true] %s330
          %333 = dma.hbm_to_vmem [thread:$0]  %s328, 128, %s331, %s318
        $region48: #{tpu_custom_call.1} parent=35 // pred_fallthru
          _
      $region36: #{tpu_custom_call.1} parent=5 // pred_fallthru
        _
      %p334 = scmp.le.s32.totalorder 1, %s21
      %p335 = scmp.lt.s32.totalorder %s21, 5
      %p336 = pnand %p334, %p335
      %p337 = pneg %p336
      // Predicated region
      $region49: #{tpu_custom_call.1} parent=5 // pred_check
        _
      $region50: #{tpu_custom_call.1} parent=5 // pred_check_branch
        %339 = sbr.rel (%p336) target = $region52
      $region51: #{tpu_custom_call.1} parent=5 // pred_region
        %s340 = ssub.s32 %s21, 1
        %s341 = sand.u32 %s104, 1
        %s342 = scalar_lea.sflag [#allocation6], %s341
        %s343 = sand.u32 %s104, 1
        %s344 = smul.addr %s343, 8
        %s345 = scalar_lea.vmem [#allocation5], %s344
        // Predicated region
        $region53: #{tpu_custom_call.1} parent=51 // pred_check
          %p346 = pneg %p117
        $region54: #{tpu_custom_call.1} parent=51 // pred_check_branch
          %348 = sbr.rel (%p346) target = $region56
        $region55: #{tpu_custom_call.1} parent=51 // pred_region
          %349 = dma.done %s342, 128
        $region56: #{tpu_custom_call.1} parent=51 // pred_fallthru
          _
        // Predicated region
        $region57: #{tpu_custom_call.1} parent=51 // pred_check
          %p350 = pneg %p222
        $region58: #{tpu_custom_call.1} parent=51 // pred_check_branch
          %352 = sbr.rel (%p350) target = $region60
        $region59: #{tpu_custom_call.1} parent=51 // pred_region
          %353 = dma.done [#allocation8], 16
        $region60: #{tpu_custom_call.1} parent=51 // pred_fallthru
          _
        %354 = sfence
        %p355 = scmp.lt.s32.totalorder %s30, 1
        %s356 = scalar_select %p355, %s30, 1
        %p357 = scmp.lt.s32.totalorder %s31, 1
        %s358 = scalar_select %p357, %s31, 1
        %s359 = smul.addr %s356, 2
        %s360 = sadd.s32 %s358, %s359
        %s361 = smul.addr %s360, 8
        %s362 = scalar_lea.vmem %s0, %s361
        %p363 = pneg %p61
        %p364 = pneg %p58
        %p365 = scmp.lt.s32.totalorder %s30, 1
        %s366 = scalar_select %p365, %s30, 1
        %p367 = scmp.lt.s32.totalorder %s31, 1
        %s368 = scalar_select %p367, %s31, 1
        %s369 = smul.addr %s366, 2
        %s370 = sadd.s32 %s368, %s369
        %s371 = smul.addr %s370, 8
        %s372 = scalar_lea.vmem %s1, %s371
        %p373 = pneg %p89
        %p374 = pneg %p86
        %s375 = sand.u32 %s104, 1
        %s376 = scalar_lea.sflag [#allocation6], %s375
        %s377 = sand.u32 %s104, 1
        %s378 = smul.addr %s377, 8
        %s379 = scalar_lea.vmem [#allocation5], %s378
        %p380 = pneg %p117
        %p381 = pneg %p114
        %p382 = pneg %p138
        %p383 = pneg %p135
        %p384 = pneg %p159
        %p385 = pneg %p156
        %p386 = pneg %p180
        %p387 = pneg %p177
        %p388 = pneg %p201
        %p389 = pneg %p198
        %p390 = pneg %p222
        %p391 = pneg %p219
        %p392 = pneg %p250
        %p393 = pneg %p247
        %s394 = sand.u32 %s237, 1
        %s395 = scalar_lea.sflag [#allocation7], %s394
        %s396 = sand.u32 %s237, 1
        %s397 = smul.addr %s396, 8
        %s398 = scalar_lea.vmem [#allocation10], %s397
        %p399 = scmp.lt.s32.totalorder %s30, 1
        %s400 = scalar_select %p399, %s30, 1
        %p401 = scmp.lt.s32.totalorder %s31, 1
        %s402 = scalar_select %p401, %s31, 1
        %s403 = smul.addr %s400, 2
        %s404 = sadd.s32 %s402, %s403
        %s405 = smul.addr %s404, 8
        %s406 = scalar_lea.vmem %s0, %s405
        %p407 = scmp.lt.s32.totalorder %s30, 1
        %s408 = scalar_select %p407, %s30, 1
        %p409 = scmp.lt.s32.totalorder %s31, 1
        %s410 = scalar_select %p409, %s31, 1
        %s411 = smul.addr %s408, 2
        %s412 = sadd.s32 %s410, %s411
        %s413 = smul.addr %s412, 8
        %s414 = scalar_lea.vmem %s1, %s413
        %v416 = vlaneseq
        %v417 = vand.u32 %v416, 127
        %v418 = vadd.s32 %v417, 128
        %vm419 = vcmp.lt.s32.totalorder %v417, 0
        %v420 = vsub.s32 0, %v417
        %v421 = vsel %vm419, %v420, %v417
        %v422 = vshrl.u32 %v421, 4
        %v423 = vand.u32 %v421, 15
        %v424 = vsub.s32 0, %v423
        %v425 = vsel %vm419, %v424, %v423
        %vm426 = vcmp.lt.s32.totalorder %v418, 0
        %v427 = vsub.s32 0, %v418
        %v428 = vsel %vm426, %v427, %v418
        %v429 = vshrl.u32 %v428, 4
        %v430 = vand.u32 %v428, 15
        %v431 = vsub.s32 0, %v430
        %v432 = vsel %vm426, %v431, %v430
        %vm433 = vcmp.ne.s32.totalorder %v425, 0
        %vm434 = vcmp.ne.s32.totalorder %v432, 0
        %vm435 = vcmp.lt.s32.totalorder %v425, 0
        %vm436 = vcmp.lt.s32.totalorder %v432, 0
        %vm437 = vmand %vm435, %vm433
        %vm438 = vmand %vm436, %vm434
        %v439 = vadd.s32 %v425, 16
        %v440 = vadd.s32 %v432, 16
        %v441 = vsel %vm437, %v439, %v425
        %v442 = vsel %vm438, %v440, %v432
        %v443 = vadd.s32 %v441, 4294967295
        %v444 = vadd.s32 %v442, 4294967295
        %vm445 = vcmp.ge.s32.totalorder %v443, 0
        %vm446 = vcmp.ge.s32.totalorder %v444, 0
        %vm447 = vcmp.lt.s32.totalorder %v443, 16
        %vm448 = vcmp.lt.s32.totalorder %v444, 16
        %vm449 = vmand %vm445, %vm447
        %vm450 = vmand %vm446, %vm448
        %v451 = vsel %vm449, 1, 0
        %v452 = vsel %vm450, 1, 0
        %v453 = vcvt.s32.f32 %v451
        %v454 = vcvt.s32.f32 %v452
        %v455 = vadd.s32 %v441, 1
        %v456 = vadd.s32 %v442, 1
        %vm457 = vcmp.ge.s32.totalorder %v455, 0
        %vm458 = vcmp.ge.s32.totalorder %v456, 0
        %vm459 = vcmp.lt.s32.totalorder %v455, 16
        %vm460 = vcmp.lt.s32.totalorder %v456, 16
        %vm461 = vmand %vm457, %vm459
        %vm462 = vmand %vm458, %vm460
        %v463 = vsel %vm461, 1, 0
        %v464 = vsel %vm462, 1, 0
        %v465 = vcvt.s32.f32 %v463
        %v466 = vcvt.s32.f32 %v464
        %v467 = vld [vmem:[%s414] sm:$0xff]
        %vm468 = vcmask 261120
        %469 = vst.msk [vmem:[#allocation2] sm:$0xff] %vm468, %v467
        %v470 = vld [vmem:[%s406] sm:$0xff]
        %472 = vrot.lane.b32.xlu0 %v470, 32
        %v473 = vpop.permute.xlu0 %472
        %vm475 = vcmask 1047808
        %476 = vst.msk [vmem:[#allocation2] sm:$0xff] %vm475, %v473
        %477 = vst.msk [vmem:[#allocation2 + $0x8] sm:$0xff] %vm468, %v473
        %v478 = vld [vmem:[%s345] sm:$0xff]
        %480 = vrot.lane.b32.xlu0 %v478, 32
        %v481 = vpop.permute.xlu0 %480
        %vm483 = vcmask 523520
        %484 = vst.msk [vmem:[#allocation2 + $0x8] sm:$0xff] %vm483, %v481
        %v485 = vld [vmem:[#allocation2] sm:$0xff]
        %v486 = vld [vmem:[#allocation2 + $0x8] sm:$0xff]
        %488 = vrot.lane.b32.xlu0 %v486, 81
        %v489 = vpop.permute.xlu0 %488
        %492 = vrot.lane.b32.xlu0 %v485, 17
        %v493 = vpop.permute.xlu0 %492
        %494 = vrot.lane.b32.xlu0 %v486, 17
        %v495 = vpop.permute.xlu0 %494
        %vm496 = vcmask 138240
        %v497 = vsel %vm496, %v493, %v495
        %v500 = vsel %vm496, %v489, %v493
        %v501 = vmul.f32 %v500, %v453
        %v502 = vmul.f32 %v497, %v454
        %v503 = vpack.c.bf16 %v501, %v501
        %v504 = vpack.c.bf16 %v502, %v502
        %v507 = vunpack.c.l.b16 %v503
        %v508 = vunpack.c.l.b16 %v504
        %v509 = vpack.c.b16 %v508, %v507
        %vm511 = vcmask 1043456
        %vm512 = vcmask 523268
        %vm513 = vmor %vm512, %vm511
        %514 = vst.msk [vmem:[#allocation3] sm:$0xff] %vm513, %v509
        %515 = vrot.lane.b32.xlu0 %v486, 80
        %v516 = vpop.permute.xlu0 %515
        %518 = vrot.lane.b32.xlu0 %v485, 16
        %v519 = vpop.permute.xlu0 %518
        %520 = vrot.lane.b32.xlu0 %v486, 16
        %v521 = vpop.permute.xlu0 %520
        %vm522 = vcmask 130048
        %v523 = vsel %vm522, %v519, %v521
        %v526 = vsel %vm522, %v516, %v519
        %v527 = vpack.c.bf16 %v526, %v526
        %v528 = vpack.c.bf16 %v523, %v523
        %v531 = vunpack.c.l.b16 %v527
        %v532 = vunpack.c.l.b16 %v528
        %v533 = vpack.c.b16 %v532, %v531
        %535 = vst.msk [vmem:[#allocation3 + $0x8] sm:$0xff] %vm513, %v533
        %536 = vrot.lane.b32.xlu0 %v486, 79
        %v537 = vpop.permute.xlu0 %536
        %539 = vrot.lane.b32.xlu0 %v485, 15
        %v540 = vpop.permute.xlu0 %539
        %541 = vrot.lane.b32.xlu0 %v486, 15
        %v542 = vpop.permute.xlu0 %541
        %vm543 = vcmask 121856
        %v544 = vsel %vm543, %v540, %v542
        %v547 = vsel %vm543, %v537, %v540
        %v548 = vmul.f32 %v547, %v465
        %v549 = vmul.f32 %v544, %v466
        %v550 = vpack.c.bf16 %v548, %v548
        %v551 = vpack.c.bf16 %v549, %v549
        %v554 = vunpack.c.l.b16 %v550
        %v555 = vunpack.c.l.b16 %v551
        %v556 = vpack.c.b16 %v555, %v554
        %558 = vst.msk [vmem:[#allocation3 + $0x10] sm:$0xff] %vm513, %v556
        %559 = vrot.lane.b32.xlu0 %v486, 65
        %v560 = vpop.permute.xlu0 %559
        %562 = vrot.lane.b32.xlu0 %v485, 1
        %v563 = vpop.permute.xlu0 %562
        %564 = vrot.lane.b32.xlu0 %v486, 1
        %v565 = vpop.permute.xlu0 %564
        %vm566 = vcmask 7168
        %v567 = vsel %vm566, %v563, %v565
        %v570 = vsel %vm566, %v560, %v563
        %v571 = vmul.f32 %v570, %v453
        %v572 = vmul.f32 %v567, %v454
        %v573 = vpack.c.bf16 %v571, %v571
        %v574 = vpack.c.bf16 %v572, %v572
        %v577 = vunpack.c.l.b16 %v573
        %v578 = vunpack.c.l.b16 %v574
        %v579 = vpack.c.b16 %v578, %v577
        %581 = vst.msk [vmem:[#allocation3 + $0x18] sm:$0xff] %vm513, %v579
        %v582 = vpack.c.bf16 %v485, %v485
        %v583 = vpack.c.bf16 %v486, %v486
        %v586 = vunpack.c.l.b16 %v582
        %v587 = vunpack.c.l.b16 %v583
        %v588 = vpack.c.b16 %v587, %v586
        %590 = vst.msk [vmem:[#allocation3 + $0x20] sm:$0xff] %vm513, %v588
        %591 = vrot.lane.b32.xlu0 %v485, 127
        %v592 = vpop.permute.xlu0 %591
        %593 = vrot.lane.b32.xlu0 %v486, 127
        %v594 = vpop.permute.xlu0 %593
        %vm595 = vcmask 1039360
        %v596 = vsel %vm595, %v592, %v594
        %599 = vrot.lane.b32.xlu0 %v485, 63
        %v600 = vpop.permute.xlu0 %599
        %vm602 = vcmask 515072
        %v603 = vsel %vm602, %v594, %v600
        %v604 = vmul.f32 %v596, %v465
        %v605 = vmul.f32 %v603, %v466
        %v606 = vpack.c.bf16 %v604, %v604
        %v607 = vpack.c.bf16 %v605, %v605
        %v610 = vunpack.c.l.b16 %v606
        %v611 = vunpack.c.l.b16 %v607
        %v612 = vpack.c.b16 %v611, %v610
        %614 = vst.msk [vmem:[#allocation3 + $0x28] sm:$0xff] %vm513, %v612
        %615 = vrot.lane.b32.xlu0 %v485, 113
        %v616 = vpop.permute.xlu0 %615
        %617 = vrot.lane.b32.xlu0 %v486, 113
        %v618 = vpop.permute.xlu0 %617
        %vm619 = vcmask 924672
        %v620 = vsel %vm619, %v616, %v618
        %623 = vrot.lane.b32.xlu0 %v485, 49
        %v624 = vpop.permute.xlu0 %623
        %vm626 = vcmask 400384
        %v627 = vsel %vm626, %v618, %v624
        %v628 = vmul.f32 %v620, %v453
        %v629 = vmul.f32 %v627, %v454
        %v630 = vpack.c.bf16 %v628, %v628
        %v631 = vpack.c.bf16 %v629, %v629
        %v634 = vunpack.c.l.b16 %v630
        %v635 = vunpack.c.l.b16 %v631
        %v636 = vpack.c.b16 %v635, %v634
        %638 = vst.msk [vmem:[#allocation3 + $0x30] sm:$0xff] %vm513, %v636
        %639 = vrot.lane.b32.xlu0 %v485, 112
        %v640 = vpop.permute.xlu0 %639
        %641 = vrot.lane.b32.xlu0 %v486, 112
        %v642 = vpop.permute.xlu0 %641
        %vm643 = vcmask 916480
        %v644 = vsel %vm643, %v640, %v642
        %647 = vrot.lane.b32.xlu0 %v485, 48
        %v648 = vpop.permute.xlu0 %647
        %vm650 = vcmask 392192
        %v651 = vsel %vm650, %v642, %v648
        %v652 = vpack.c.bf16 %v644, %v644
        %v653 = vpack.c.bf16 %v651, %v651
        %v656 = vunpack.c.l.b16 %v652
        %v657 = vunpack.c.l.b16 %v653
        %v658 = vpack.c.b16 %v657, %v656
        %660 = vst.msk [vmem:[#allocation3 + $0x38] sm:$0xff] %vm513, %v658
        %661 = vrot.lane.b32.xlu0 %v485, 111
        %v662 = vpop.permute.xlu0 %661
        %663 = vrot.lane.b32.xlu0 %v486, 111
        %v664 = vpop.permute.xlu0 %663
        %vm665 = vcmask 908288
        %v666 = vsel %vm665, %v662, %v664
        %669 = vrot.lane.b32.xlu0 %v485, 47
        %v670 = vpop.permute.xlu0 %669
        %vm672 = vcmask 384000
        %v673 = vsel %vm672, %v664, %v670
        %v674 = vmul.f32 %v666, %v465
        %v675 = vmul.f32 %v673, %v466
        %v676 = vpack.c.bf16 %v674, %v674
        %v677 = vpack.c.bf16 %v675, %v675
        %v680 = vunpack.c.l.b16 %v676
        %v681 = vunpack.c.l.b16 %v677
        %v682 = vpack.c.b16 %v681, %v680
        %684 = vst.msk [vmem:[#allocation3 + $0x40] sm:$0xff] %vm513, %v682
        %v685 = vld [vmem:[%s3] sm:$0xf]
        %v686 = vld [vmem:[%s3 + $0x4] sm:$0xf]
        %v687 = vld [vmem:[#allocation3] sm:$0xff]
        %v688 = vld [vmem:[#allocation3 + $0x8] sm:$0xff]
        %v689 = vld [vmem:[#allocation3 + $0x10] sm:$0xff]
        %v690 = vld [vmem:[#allocation3 + $0x18] sm:$0xff]
        %v691 = vld [vmem:[#allocation3 + $0x20] sm:$0xff]
        %v692 = vld [vmem:[#allocation3 + $0x28] sm:$0xff]
        %v693 = vld [vmem:[#allocation3 + $0x30] sm:$0xff]
        %v694 = vld [vmem:[#allocation3 + $0x38] sm:$0xff]
        %v695 = vld [vmem:[#allocation3 + $0x40] sm:$0xff]
        %v696 = vld [vmem:[%s4] sm:$0xff]
        %v697 = vld [vmem:[%s4 + $0x8] sm:$0xff]
        %699 = vset.pattern.permute.xlu0 0
        %700 = vperm.xlu0 %699, %v696
        %v701 = vpop.permute.xlu0 %700
        %704 = vset.pattern.permute.xlu0 0
        %705 = vperm.xlu0 %704, %v697
        %v706 = vpop.permute.xlu0 %705
        %v710 = vunpack.c.l.b16 %v685
        %v711 = vunpack.c.l.b16 %v686
        %v712 = vpack.c.b16 %v711, %v710
        %v722 = vunpack.c.l.b16 %v687
        %v723 = vunpack.c.h.b16 %v687
        %v724 = vunpack.c.l.b16 %v688
        %v725 = vunpack.c.h.b16 %v688
        %v726 = vunpack.c.l.b16 %v689
        %v727 = vunpack.c.h.b16 %v689
        %v728 = vunpack.c.l.b16 %v690
        %v729 = vunpack.c.h.b16 %v690
        %v730 = vunpack.c.l.b16 %v691
        %v731 = vunpack.c.h.b16 %v691
        %v732 = vunpack.c.l.b16 %v692
        %v733 = vunpack.c.h.b16 %v692
        %v734 = vunpack.c.l.b16 %v693
        %v735 = vunpack.c.h.b16 %v693
        %v736 = vunpack.c.l.b16 %v694
        %v737 = vunpack.c.h.b16 %v694
        %v738 = vunpack.c.l.b16 %v695
        %v739 = vunpack.c.h.b16 %v695
        %v740 = vpack.c.b16 %v724, %v722
        %v741 = vpack.c.b16 %v725, %v723
        %v742 = vpack.c.b16 %v728, %v726
        %v743 = vpack.c.b16 %v729, %v727
        %v744 = vpack.c.b16 %v732, %v730
        %v745 = vpack.c.b16 %v733, %v731
        %v746 = vpack.c.b16 %v736, %v734
        %v747 = vpack.c.b16 %v737, %v735
        %v748 = vpack.c.b16 %v738, %v738
        %v749 = vpack.c.b16 %v739, %v739
        %vm758 = vcmask 588800
        %v760 = vsel %vm758, %v712, 0
        %v763 = vsel %vm511, %v748, 0
        %v766 = vsel %vm511, %v749, 0
        %768 = vmatprep.subr.bf16.mxu0 %v741
        %769 = vmatpush1.bf16.msra.mxu0 %v740
        %770 = vmatprep.subr.bf16.mxu0 %v743
        %771 = vmatpush1.bf16.msra.mxu0 %v742
        %772 = vmatprep.subr.bf16.mxu0 %v745
        %773 = vmatpush1.bf16.msra.mxu0 %v744
        %774 = vmatprep.subr.bf16.mxu0 %v747
        %775 = vmatpush1.bf16.msra.mxu0 %v746
        %776 = vmatprep.subr.bf16.mxu0 %v766
        %777 = vmatpush1.bf16.msra.mxu0 %v763
        %778 = vmatprep.subr.bf16.mxu0 0
        %779 = vmatpush1.bf16.msra.mxu0 0
        %780 = vmatprep.subr.bf16.mxu0 0
        %781 = vmatpush1.bf16.msra.mxu0 0
        %782 = vmatprep.subr.bf16.mxu0 0
        %783 = vmatpush1.bf16.msra.mxu0 0
        %784 = vmatprep.subr.bf16.mxu0 0
        %785 = vmatpush1.bf16.msra.mxu0 0
        %786 = vmatprep.subr.bf16.mxu0 0
        %787 = vmatpush1.bf16.msra.mxu0 0
        %788 = vmatprep.subr.bf16.mxu0 0
        %789 = vmatpush1.bf16.msra.mxu0 0
        %790 = vmatprep.subr.bf16.mxu0 0
        %791 = vmatpush1.bf16.msra.mxu0 0
        %792 = vmatprep.subr.bf16.mxu0 0
        %793 = vmatpush1.bf16.msra.mxu0 0
        %794 = vmatprep.subr.bf16.mxu0 0
        %795 = vmatpush1.bf16.msra.mxu0 0
        %796 = vmatprep.subr.bf16.mxu0 0
        %797 = vmatpush1.bf16.msra.mxu0 0
        %798 = vmatprep.subr.bf16.mxu0 0
        %799 = vmatpush1.bf16.msra.mxu0 0
        %800 = vmatprep.mubr.bf16.mxu0 0
        %801 = vmatmul.mubr.bf16.gmra.mrb[0].mxu0 %v760
        %v802 = vpop.f32.mrb[0].mxu0
        %v803 = vadd.f32 %v701, %v802
        %v804 = vpop.f32.mrb[0].mxu0
        %v805 = vadd.f32 %v701, %v804
        %v806 = vpop.f32.mrb[0].mxu0
        %v807 = vadd.f32 %v706, %v806
        %v808 = vpop.f32.mrb[0].mxu0
        %v809 = vadd.f32 %v706, %v808
        %810 = vdwg.mxu0
        %v811 = vmax.f32 %v803, 0.0
        %v812 = vmax.f32 %v805, 0.0
        %v813 = vmax.f32 %v807, 0.0
        %v814 = vmax.f32 %v809, 0.0
        %v815 = vpack.c.bf16 %v813, %v811
        %v816 = vpack.c.bf16 %v814, %v812
        %817 = vst [vmem:[#allocation4] sm:$0xff] %v815
        %vm818 = vcmask 523264
        %819 = vst.msk [vmem:[#allocation4 + $0x8] sm:$0xff] %vm818, %v816
        %p820 = scmp.eq.s32.totalorder %s31, 0
        // Predicated region
        $region61: #{tpu_custom_call.1} parent=51 // pred_check
          %p821 = pneg %p820
        $region62: #{tpu_custom_call.1} parent=51 // pred_check_branch
          %823 = sbr.rel (%p821) target = $region64
        $region63: #{tpu_custom_call.1} parent=51 // pred_region
          %vm824 = vcmask 261248
          %825 = vst.msk [vmem:[#allocation4] sm:$0xff] %vm824, 0
        $region64: #{tpu_custom_call.1} parent=51 // pred_fallthru
          _
        %p826 = scmp.eq.s32.totalorder %s31, 1
        // Predicated region
        $region65: #{tpu_custom_call.1} parent=51 // pred_check
          %p827 = pneg %p826
        $region66: #{tpu_custom_call.1} parent=51 // pred_check_branch
          %829 = sbr.rel (%p827) target = $region68
        $region67: #{tpu_custom_call.1} parent=51 // pred_region
          %vm830 = vcmask 392448
          %831 = vst.msk [vmem:[#allocation4 + $0x8] sm:$0xff] %vm830, 0
        $region68: #{tpu_custom_call.1} parent=51 // pred_fallthru
          _
        %v832 = vld [vmem:[%s5] sm:$0xf]
        %v833 = vld [vmem:[%s5 + $0x4] sm:$0xf]
        %v834 = vld [vmem:[%s5 + $0x8] sm:$0xf]
        %v835 = vld [vmem:[%s5 + $0xc] sm:$0xf]
        %v836 = vld [vmem:[%s5 + $0x10] sm:$0xf]
        %v837 = vld [vmem:[%s5 + $0x14] sm:$0xf]
        %v838 = vld [vmem:[%s5 + $0x18] sm:$0xf]
        %v839 = vld [vmem:[%s5 + $0x1c] sm:$0xf]
        %v840 = vld [vmem:[%s5 + $0x20] sm:$0xf]
        %v841 = vld [vmem:[#allocation4] sm:$0xff]
        %v842 = vld [vmem:[#allocation4 + $0x8] sm:$0xff]
        %v852 = vunpack.c.l.b16 %v832
        %v853 = vunpack.c.l.b16 %v833
        %v854 = vunpack.c.l.b16 %v834
        %v855 = vunpack.c.l.b16 %v835
        %v856 = vunpack.c.l.b16 %v836
        %v857 = vunpack.c.l.b16 %v837
        %v858 = vunpack.c.l.b16 %v838
        %v859 = vunpack.c.l.b16 %v839
        %v860 = vunpack.c.l.b16 %v840
        %v861 = vpack.c.b16 %v853, %v852
        %v862 = vpack.c.b16 %v855, %v854
        %v863 = vpack.c.b16 %v857, %v856
        %v864 = vpack.c.b16 %v859, %v858
        %v865 = vpack.c.b16 %v860, %v860
        %v867 = vsel %vm522, %v861, 0
        %v870 = vsel %vm522, %v862, 0
        %v873 = vsel %vm522, %v863, 0
        %v876 = vsel %vm522, %v864, 0
        %v879 = vsel %vm522, %v865, 0
        %881 = vmatprep.subr.bf16.mxu0 %v842
        %882 = vmatpush1.bf16.msra.mxu0 %v841
        %883 = vmatprep.subr.bf16.mxu0 0
        %884 = vmatpush1.bf16.msra.mxu0 0
        %885 = vmatprep.subr.bf16.mxu0 0
        %886 = vmatpush1.bf16.msra.mxu0 0
        %887 = vmatprep.subr.bf16.mxu0 0
        %888 = vmatpush1.bf16.msra.mxu0 0
        %889 = vmatprep.subr.bf16.mxu0 0
        %890 = vmatpush1.bf16.msra.mxu0 0
        %891 = vmatprep.subr.bf16.mxu0 0
        %892 = vmatpush1.bf16.msra.mxu0 0
        %893 = vmatprep.subr.bf16.mxu0 0
        %894 = vmatpush1.bf16.msra.mxu0 0
        %895 = vmatprep.subr.bf16.mxu0 0
        %896 = vmatpush1.bf16.msra.mxu0 0
        %897 = vmatprep.subr.bf16.mxu0 0
        %898 = vmatpush1.bf16.msra.mxu0 0
        %899 = vmatprep.subr.bf16.mxu0 0
        %900 = vmatpush1.bf16.msra.mxu0 0
        %901 = vmatprep.subr.bf16.mxu0 0
        %902 = vmatpush1.bf16.msra.mxu0 0
        %903 = vmatprep.subr.bf16.mxu0 0
        %904 = vmatpush1.bf16.msra.mxu0 0
        %905 = vmatprep.subr.bf16.mxu0 0
        %906 = vmatpush1.bf16.msra.mxu0 0
        %907 = vmatprep.subr.bf16.mxu0 0
        %908 = vmatpush1.bf16.msra.mxu0 0
        %909 = vmatprep.subr.bf16.mxu0 0
        %910 = vmatpush1.bf16.msra.mxu0 0
        %911 = vmatprep.subr.bf16.mxu0 0
        %912 = vmatpush1.bf16.msra.mxu0 0
        %913 = vmatprep.mubr.bf16.mxu0 0
        %914 = vmatmul.mubr.bf16.gmra.mrb[0].mxu0 %v867
        %v915 = vpop.f32.mrb[0].mxu0
        %v916 = vadd.f32 0.0, %v915
        %v917 = vpop.f32.mrb[0].mxu0
        %v918 = vadd.f32 0.0, %v917
        %v919 = vpop.f32.mrb[0].mxu0
        %v920 = vadd.f32 0.0, %v919
        %v921 = vpop.f32.mrb[0].mxu0
        %v922 = vadd.f32 0.0, %v921
        %923 = vmatprep.mubr.bf16.mxu0 0
        %924 = vmatmul.mubr.bf16.gmra.mrb[0].mxu0 %v870
        %v925 = vpop.f32.mrb[0].mxu0
        %v926 = vadd.f32 0.0, %v925
        %v927 = vpop.f32.mrb[0].mxu0
        %v928 = vadd.f32 0.0, %v927
        %v929 = vpop.f32.mrb[0].mxu0
        %v930 = vadd.f32 0.0, %v929
        %v931 = vpop.f32.mrb[0].mxu0
        %v932 = vadd.f32 0.0, %v931
        %933 = vmatprep.mubr.bf16.mxu0 0
        %934 = vmatmul.mubr.bf16.gmra.mrb[0].mxu0 %v873
        %v935 = vpop.f32.mrb[0].mxu0
        %v936 = vadd.f32 0.0, %v935
        %v937 = vpop.f32.mrb[0].mxu0
        %v938 = vadd.f32 0.0, %v937
        %v939 = vpop.f32.mrb[0].mxu0
        %v940 = vadd.f32 0.0, %v939
        %v941 = vpop.f32.mrb[0].mxu0
        %v942 = vadd.f32 0.0, %v941
        %943 = vmatprep.mubr.bf16.mxu0 0
        %944 = vmatmul.mubr.bf16.gmra.mrb[0].mxu0 %v876
        %v945 = vpop.f32.mrb[0].mxu0
        %v946 = vadd.f32 0.0, %v945
        %v947 = vpop.f32.mrb[0].mxu0
        %v948 = vadd.f32 0.0, %v947
        %v949 = vpop.f32.mrb[0].mxu0
        %v950 = vadd.f32 0.0, %v949
        %v951 = vpop.f32.mrb[0].mxu0
        %v952 = vadd.f32 0.0, %v951
        %953 = vmatprep.mubr.bf16.mxu0 0
        %954 = vmatmul.mubr.bf16.gmra.mrb[0].mxu0 %v879
        %v955 = vpop.f32.mrb[0].mxu0
        %v956 = vadd.f32 0.0, %v955
        %v957 = vpop.f32.mrb[0].mxu0
        %v958 = vadd.f32 0.0, %v957
        %v959 = vpop.f32.mrb[0].mxu0
        %v960 = vpop.f32.mrb[0].mxu0
        %961 = vdwg.mxu0
        %963 = vrot.lane.b32.xlu0 %v918, 81
        %v964 = vpop.permute.xlu0 %963
        %967 = vrot.lane.b32.xlu0 %v916, 17
        %v968 = vpop.permute.xlu0 %967
        %969 = vrot.lane.b32.xlu0 %v918, 17
        %v970 = vpop.permute.xlu0 %969
        %v971 = vsel %vm496, %v968, %v970
        %v974 = vsel %vm496, %v964, %v968
        %v975 = vmul.f32 %v974, %v453
        %v976 = vmul.f32 %v971, %v454
        %v977 = vadd.f32 %v975, 0.0
        %v978 = vadd.f32 %v976, 0.0
        %980 = vrot.lane.b32.xlu0 %v922, 80
        %v981 = vpop.permute.xlu0 %980
        %984 = vrot.lane.b32.xlu0 %v920, 16
        %v985 = vpop.permute.xlu0 %984
        %986 = vrot.lane.b32.xlu0 %v922, 16
        %v987 = vpop.permute.xlu0 %986
        %v988 = vsel %vm522, %v985, %v987
        %v991 = vsel %vm522, %v981, %v985
        %v992 = vadd.f32 %v977, %v991
        %v993 = vadd.f32 %v978, %v988
        %995 = vrot.lane.b32.xlu0 %v928, 79
        %v996 = vpop.permute.xlu0 %995
        %999 = vrot.lane.b32.xlu0 %v926, 15
        %v1000 = vpop.permute.xlu0 %999
        %1001 = vrot.lane.b32.xlu0 %v928, 15
        %v1002 = vpop.permute.xlu0 %1001
        %v1003 = vsel %vm543, %v1000, %v1002
        %v1006 = vsel %vm543, %v996, %v1000
        %v1007 = vmul.f32 %v1006, %v465
        %v1008 = vmul.f32 %v1003, %v466
        %v1009 = vadd.f32 %v992, %v1007
        %v1010 = vadd.f32 %v993, %v1008
        %1012 = vrot.lane.b32.xlu0 %v932, 65
        %v1013 = vpop.permute.xlu0 %1012
        %1016 = vrot.lane.b32.xlu0 %v930, 1
        %v1017 = vpop.permute.xlu0 %1016
        %1018 = vrot.lane.b32.xlu0 %v932, 1
        %v1019 = vpop.permute.xlu0 %1018
        %v1020 = vsel %vm566, %v1017, %v1019
        %v1023 = vsel %vm566, %v1013, %v1017
        %v1024 = vmul.f32 %v1023, %v453
        %v1025 = vmul.f32 %v1020, %v454
        %v1026 = vadd.f32 %v1009, %v1024
        %v1027 = vadd.f32 %v1010, %v1025
        %v1028 = vadd.f32 %v1026, %v936
        %v1029 = vadd.f32 %v1027, %v938
        %1032 = vrot.lane.b32.xlu0 %v940, 127
        %v1033 = vpop.permute.xlu0 %1032
        %1034 = vrot.lane.b32.xlu0 %v942, 127
        %v1035 = vpop.permute.xlu0 %1034
        %v1036 = vsel %vm595, %v1033, %v1035
        %1039 = vrot.lane.b32.xlu0 %v940, 63
        %v1040 = vpop.permute.xlu0 %1039
        %v1042 = vsel %vm602, %v1035, %v1040
        %v1043 = vmul.f32 %v1036, %v465
        %v1044 = vmul.f32 %v1042, %v466
        %v1045 = vadd.f32 %v1028, %v1043
        %v1046 = vadd.f32 %v1029, %v1044
        %1049 = vrot.lane.b32.xlu0 %v946, 113
        %v1050 = vpop.permute.xlu0 %1049
        %1051 = vrot.lane.b32.xlu0 %v948, 113
        %v1052 = vpop.permute.xlu0 %1051
        %v1053 = vsel %vm619, %v1050, %v1052
        %1056 = vrot.lane.b32.xlu0 %v946, 49
        %v1057 = vpop.permute.xlu0 %1056
        %v1059 = vsel %vm626, %v1052, %v1057
        %v1060 = vmul.f32 %v1053, %v453
        %v1061 = vmul.f32 %v1059, %v454
        %v1062 = vadd.f32 %v1045, %v1060
        %v1063 = vadd.f32 %v1046, %v1061
        %1066 = vrot.lane.b32.xlu0 %v950, 112
        %v1067 = vpop.permute.xlu0 %1066
        %1068 = vrot.lane.b32.xlu0 %v952, 112
        %v1069 = vpop.permute.xlu0 %1068
        %v1070 = vsel %vm643, %v1067, %v1069
        %1073 = vrot.lane.b32.xlu0 %v950, 48
        %v1074 = vpop.permute.xlu0 %1073
        %v1076 = vsel %vm650, %v1069, %v1074
        %v1077 = vadd.f32 %v1062, %v1070
        %v1078 = vadd.f32 %v1063, %v1076
        %1081 = vrot.lane.b32.xlu0 %v956, 111
        %v1082 = vpop.permute.xlu0 %1081
        %1083 = vrot.lane.b32.xlu0 %v958, 111
        %v1084 = vpop.permute.xlu0 %1083
        %v1085 = vsel %vm665, %v1082, %v1084
        %1088 = vrot.lane.b32.xlu0 %v956, 47
        %v1089 = vpop.permute.xlu0 %1088
        %v1091 = vsel %vm672, %v1084, %v1089
        %v1092 = vmul.f32 %v1085, %v465
        %v1093 = vmul.f32 %v1091, %v466
        %v1094 = vadd.f32 %v1077, %v1092
        %v1095 = vadd.f32 %v1078, %v1093
        %v1096 = vld [vmem:[%s6] sm:$0xff]
        %1098 = vset.pattern.permute.xlu0 0
        %1099 = vperm.xlu0 %1098, %v1096
        %v1100 = vpop.permute.xlu0 %1099
        %v1102 = vadd.f32 %v1094, %v1100
        %v1103 = vadd.f32 %v1095, %v1100
        %s1104 = sld [smem:[#allocation9]]
        %v1105 = vstv %s1104
        %v1106 = vmul.f32 %v1105, %v1102
        %v1107 = vmul.f32 %v1105, %v1103
        %s1108 = sld [smem:[#allocation9 + $0x1]]
        %v1109 = vld [vmem:[%s406] sm:$0xff]
        %v1110 = vstv %s1108
        %v1111 = vmul.f32 %v1110, %v1109
        %1113 = vrot.lane.b32.xlu0 %v1111, 32
        %v1114 = vpop.permute.xlu0 %1113
        %v1116 = vadd.f32 %v1106, %v1114
        %v1117 = vadd.f32 %v1107, %v1114
        %1120 = vrot.lane.b32.xlu0 %v1116, 96
        %v1121 = vpop.permute.xlu0 %1120
        %1122 = vrot.lane.b32.xlu0 %v1117, 96
        %v1123 = vpop.permute.xlu0 %1122
        %vm1124 = vcmask 785408
        %v1125 = vsel %vm1124, %v1121, %v1123
        %1127 = vst [vmem:[%s398] sm:$0xff] %v1125
        %s1128 = sand.u32 %s237, 1
        %s1129 = scalar_lea.sflag [#allocation7], %s1128
        %s1130 = sand.u32 %s237, 1
        %s1131 = smul.addr %s1130, 8
        %s1132 = scalar_lea.vmem [#allocation10], %s1131
        // Predicated region
        $region69: #{tpu_custom_call.1} parent=51 // pred_check
          %p1133 = pneg %p247
        $region70: #{tpu_custom_call.1} parent=51 // pred_check_branch
          %1135 = sbr.rel (%p1133) target = $region72
        $region71: #{tpu_custom_call.1} parent=51 // pred_region
          %s1137 = ssub.s32 128, 128
          %1138 = vsyncadd %s1129, %s1137
          %s1139 = smul.addr %s30, 2
          %s1140 = sadd.s32 %s31, %s1139
          %s1141 = smul.addr %s1140, 128
          %s1142 = scalar_lea.hbm %s8, %s1141
          %s1144 = sshll.u32 %s1132, 4
          %s1145 = int_to_ptr.vmem [resolvable:$true] %s1144
          %1147 = dma.vmem_to_hbm [thread:$0]  %s1145, 128, %s1142, %s1129
        $region72: #{tpu_custom_call.1} parent=51 // pred_fallthru
          _
      $region52: #{tpu_custom_call.1} parent=5 // pred_fallthru
        _
      %p1148 = scmp.le.s32.totalorder 2, %s21
      // Predicated region
      $region73: #{tpu_custom_call.1} parent=5 // pred_check
        %p1149 = pneg %p1148
      $region74: #{tpu_custom_call.1} parent=5 // pred_check_branch
        %1151 = sbr.rel (%p1149) target = $region76
      $region75: #{tpu_custom_call.1} parent=5 // pred_region
        %s1152 = ssub.s32 %s21, 2
        // Predicated region
        $region77: #{tpu_custom_call.1} parent=75 // pred_check
          %p1153 = pneg %p253
        $region78: #{tpu_custom_call.1} parent=75 // pred_check_branch
          %1155 = sbr.rel (%p1153) target = $region80
        $region79: #{tpu_custom_call.1} parent=75 // pred_region
          %s1156 = sand.u32 %s238, 1
          %s1157 = scalar_lea.sflag [#allocation7], %s1156
          %s1158 = sand.u32 %s238, 1
          %s1159 = smul.addr %s1158, 8
          %s1160 = scalar_lea.vmem [#allocation10], %s1159
          %1161 = dma.done %s1157, 128
        $region80: #{tpu_custom_call.1} parent=75 // pred_fallthru
          _
      $region76: #{tpu_custom_call.1} parent=5 // pred_fallthru
        _
    $region6: #{tpu_custom_call.1} parent=1 // loop_footer
      %s25 = sadd.s32 1, %s21
    $region7: #{tpu_custom_call.1} parent=1 // loop_footer_branch
      %20 = sbr.rel target = $region3
    $region8: #{tpu_custom_call.1} parent=1 // loop_exit
      _
    %1162 = vsyncpa [#allocation6], 1
    %s1163 = scalar_lea.sflag [#allocation6], 1
    %1164 = vsyncpa %s1163, 1
    %1165 = vsyncpa [#allocation7], 1
    %s1166 = scalar_lea.sflag [#allocation7], 1
    %1167 = vsyncpa %s1166, 1
    %1168 = vsyncpa [#allocation8], 1
    %s1169 = scalar_lea.sflag [#allocation8], 1
    %1170 = vsyncpa %s1169, 1

</llo_original>
